<compile_context>
chip_gen: v6e
topology: v6e:2x2x1
jax: 0.10.0
libtpu: 0.0.40
codegen_flags: <defaults>
</compile_context>

<pallas_src>
import jax
import jax.numpy as jnp
from jax import lax
from jax.experimental import pallas as pl
from jax.experimental.pallas import tpu as pltpu


# Conservative budget for tiles + resident weight/bias (bytes).  Fits inside
# the scoped-VMEM window requested below on every current generation
# (v5e/v6e: 128 MiB physical, v7x: 64 MiB physical).
_VMEM_TILE_BUDGET = 24 * 1024 * 1024
_VMEM_LIMIT_BYTES = 32 * 1024 * 1024
_MAX_TILE_M = 4096


def _round_up(x, m):
    return ((x + m - 1) // m) * m


# ----------------------------- Pallas kernel ------------------------------- #

def _fc_kernel(x_ref, w_ref, b_ref, o_ref):
    # x_ref: (TILE_M, K); w_ref: (N, K) native nn.Linear layout; b_ref: (1, N)
    acc = lax.dot_general(
        x_ref[...], w_ref[...],
        dimension_numbers=(((1,), (1,)), ((), ())),  # contract K with K (transpose folded into MXU op)
        preferred_element_type=jnp.float32,
        precision=lax.Precision.HIGHEST,
    )
    o_ref[...] = (acc + b_ref[...]).astype(o_ref.dtype)


def _pick_tile_m(m, k, n):
    """Largest row tile (multiple of 8) whose working set fits the VMEM budget."""
    m_up = _round_up(max(m, 1), 8)
    per_row = 2 * (k + n) * 4          # x tile + out tile, double-buffered, f32
    fixed = 2 * (k * n + n) * 4        # weight + bias, counted double-buffered (conservative)
    rows = max((_VMEM_TILE_BUDGET - fixed) // per_row, 8)
    tile = min(m_up, (rows // 8) * 8, _MAX_TILE_M)
    return max(tile, 8)


def linear_pallas(x2d, weight, bias):
    """y = x2d @ weight.T + bias.  x2d: (M, K) f32, weight: (N, K), bias: (N,)."""
    M, K = x2d.shape
    N = weight.shape[0]

    tile_m = _pick_tile_m(M, K, N)
    grid_m = pl.cdiv(M, tile_m)        # ragged last block handled by Pallas masking

    return pl.pallas_call(
        _fc_kernel,
        out_shape=jax.ShapeDtypeStruct((M, N), jnp.float32),
        grid=(grid_m,),
        in_specs=[
            pl.BlockSpec((tile_m, K), lambda i: (i, 0)),   # row tile of x
            pl.BlockSpec((N, K), lambda i: (0, 0)),        # full weight, VMEM-resident
            pl.BlockSpec((1, N), lambda i: (0, 0)),        # bias row, VMEM-resident
        ],
        out_specs=pl.BlockSpec((tile_m, N), lambda i: (i, 0)),  # lane-dense stores
        compiler_params=pltpu.CompilerParams(
            dimension_semantics=("parallel",),
            vmem_limit_bytes=_VMEM_LIMIT_BYTES,
        ),
    )(x2d, weight, bias.reshape(1, N))


# ------------------------------ module wrapper ------------------------------ #

def encoder_with_fc(x, weight, bias):
    """EncoderWithFC.forward: nn.Linear(in_channels, hidden_size) over x's last dim.

    x:      (..., in_channels) float32 (typically (B, T, in_channels))
    weight: (hidden_size, in_channels)  -- native PyTorch nn.Linear layout
    bias:   (hidden_size,)
    returns (..., hidden_size)
    """
    in_channels = x.shape[-1]
    hidden_size = weight.shape[0]
    lead = x.shape[:-1]
    x2d = x.reshape(-1, in_channels)

    # Keep the output block lane-dense: pad hidden to a multiple of 128 only if
    # needed (never triggers at the OCR-neck demo shapes).
    n_pad = (-hidden_size) % 128
    if n_pad:
        weight = jnp.pad(weight, ((0, n_pad), (0, 0)))
        bias = jnp.pad(bias, ((0, n_pad),))

    y = linear_pallas(x2d, weight, bias)
    if n_pad:
        y = y[:, :hidden_size]
    return y.reshape(*lead, hidden_size)


# ----------------------------------- demo ----------------------------------- #

if __name__ == "__main__":
    # Small shapes consistent with the OCR neck: (batch, seq, in_channels).
    B, T, Cin, hidden = 2, 128, 64, 128

    key = jax.random.PRNGKey(0)
    kx, kw, kb = jax.random.split(key, 3)
    x = jax.random.normal(kx, (B, T, Cin), jnp.float32)
    weight = 0.02 * jax.random.normal(kw, (hidden, Cin), jnp.float32)
    bias = 0.02 * jax.random.normal(kb, (hidden,), jnp.float32)

    fwd = jax.jit(encoder_with_fc)
    out = fwd(x, weight, bias)
    jax.block_until_ready(out)

    assert out.shape == (B, T, hidden), out.shape
    ref = (jnp.dot(x.reshape(-1, Cin), weight.T,
                   precision=lax.Precision.HIGHEST).reshape(B, T, hidden) + bias)
    assert bool(jnp.all(jnp.isfinite(out)))
    assert bool(jnp.allclose(out, ref, atol=1e-5, rtol=1e-5))
    print("KERNEL_OK")
</pallas_src>

<mosaic_0001>
module attributes {stable_mosaic.version = 11 : i64} {
  func.func @_fc_kernel(%arg0: i32, %arg1: memref<256x64xf32, #tpu.memory_space<vmem>>, %arg2: memref<128x64xf32, #tpu.memory_space<vmem>>, %arg3: memref<1x128xf32, #tpu.memory_space<vmem>>, %arg4: memref<256x128xf32, #tpu.memory_space<vmem>>) attributes {dimension_semantics = [#tpu.dimension_semantics<parallel>], iteration_bounds = array<i64: 1>, scalar_prefetch = 0 : i64, scratch_operands = 0 : i64, tpu.core_type = #tpu.core_type<tc>, window_params = [{transform_indices = @transform_0, window_bounds = array<i64: 256, 64>}, {pipeline_mode = #tpu.pipeline_mode<synchronous>, transform_indices = @transform_1, window_bounds = array<i64: 128, 64>}, {pipeline_mode = #tpu.pipeline_mode<synchronous>, transform_indices = @transform_2, window_bounds = array<i64: 1, 128>}, {transform_indices = @transform_3, window_bounds = array<i64: 256, 128>}]} {
    %c0 = arith.constant 0 : index
    %c0_0 = arith.constant 0 : index
    %0 = vector.load %arg1[%c0, %c0_0] : memref<256x64xf32, #tpu.memory_space<vmem>>, vector<256x64xf32>
    %c0_1 = arith.constant 0 : index
    %c0_2 = arith.constant 0 : index
    %1 = vector.load %arg2[%c0_1, %c0_2] : memref<128x64xf32, #tpu.memory_space<vmem>>, vector<128x64xf32>
    %cst = arith.constant dense<0.000000e+00> : vector<256x128xf32>
    %2 = tpu.matmul %0, %1, %cst {dimension_numbers = #tpu.dot_dimension_numbers<[1], [1], [0], [0], [0, 0, 1, 0], [], []>, precision = #tpu.contract_precision<fp32>} : vector<256x64xf32>, vector<128x64xf32>, vector<256x128xf32> -> vector<256x128xf32>
    %c0_3 = arith.constant 0 : index
    %c0_4 = arith.constant 0 : index
    %3 = vector.load %arg3[%c0_3, %c0_4] : memref<1x128xf32, #tpu.memory_space<vmem>>, vector<1x128xf32>
    %4 = vector.broadcast %3 : vector<1x128xf32> to vector<256x128xf32>
    %5 = arith.addf %2, %4 : vector<256x128xf32>
    %c0_5 = arith.constant 0 : index
    %c0_6 = arith.constant 0 : index
    %6 = vector.load %arg4[%c0_5, %c0_6] : memref<256x128xf32, #tpu.memory_space<vmem>>, vector<256x128xf32>
    tpu.vector_store %arg4[%c0_5, %c0_6], %5 {strides = array<i32>} : memref<256x128xf32, #tpu.memory_space<vmem>>, vector<256x128xf32>,
    return
  }
  func.func @transform_0(%arg0: i32) -> (i32, i32) {
    %c0_i32 = arith.constant 0 : i32
    %c0_i32_0 = arith.constant 0 : i32
    return %arg0, %c0_i32 : i32, i32
  }
  func.func @transform_1(%arg0: i32) -> (i32, i32) {
    %c0_i32 = arith.constant 0 : i32
    %c0_i32_0 = arith.constant 0 : i32
    %c0_i32_1 = arith.constant 0 : i32
    return %c0_i32, %c0_i32_0 : i32, i32
  }
  func.func @transform_2(%arg0: i32) -> (i32, i32) {
    %c0_i32 = arith.constant 0 : i32
    %c0_i32_0 = arith.constant 0 : i32
    %c0_i32_1 = arith.constant 0 : i32
    return %c0_i32, %c0_i32_0 : i32, i32
  }
  func.func @transform_3(%arg0: i32) -> (i32, i32) {
    %c0_i32 = arith.constant 0 : i32
    %c0_i32_0 = arith.constant 0 : i32
    return %arg0, %c0_i32 : i32, i32
  }
}

</mosaic_0001>

<llo_original>
// kernel: encoder_with_fc.1
$region0: #{encoder_with_fc.1}
  #allocation0 [shape = 'u32[]', space=smem, size = 0x4, offset = 0x4, fixed_abs, tag = 'smem constant byte address 0x4 - core index']
  #allocation1 [shape = 'u32[144,128]{1,0:T(1,128)}', space=vmem, size = 0x12000, scoped, tag = 'internal scratch']
  %s0 = inlined_call_operand.vmem [shape: f32[256,64], index: 0, kind: input, shape index: {}]
  %s1 = inlined_call_operand.vmem [shape: f32[128,64], index: 1, kind: input, shape index: {}]
  %s2 = inlined_call_operand.vmem [shape: f32[1,128], index: 2, kind: input, shape index: {}]
  %s3 = inlined_call_operand.hbm [shape: f32[256,128], index: 3, kind: output, shape index: {}]
  %s4 = sld [smem:[#allocation0]]
  $region22: #{encoder_with_fc.1} parent=0
    _
  %s6 = ssub.s32 1, %s4
  %s7 = scalar_select 0, %s6, %s4
  $region1: #{encoder_with_fc.1} parent=0
    #allocation2 [shape = 'u8[131072]{0}', space=vmem, size = 0x20000, scoped, tag = 'output window, operand 0, single buffered']
    #allocation3 [shape = 's32[1]{0}', space=sflag, size = 0x4, scoped, tag = 'scoped memory for encoder_with_fc.1']
    %8 = vsyncpa [#allocation3], 0
    // Predicated region
    $region2: #{encoder_with_fc.1} parent=1 // pred_check
      _
    $region3: #{encoder_with_fc.1} parent=1 // pred_check_branch
      %10 = sbr.rel (0) target = $region5
    $region4: #{encoder_with_fc.1} parent=1 // pred_region
      _
    $region5: #{encoder_with_fc.1} parent=1 // pred_fallthru
      _
    // Predicated region
    $region6: #{encoder_with_fc.1} parent=1 // pred_check
      _
    $region7: #{encoder_with_fc.1} parent=1 // pred_check_branch
      %12 = sbr.rel (0) target = $region9
    $region8: #{encoder_with_fc.1} parent=1 // pred_region
      _
    $region9: #{encoder_with_fc.1} parent=1 // pred_fallthru
      _
    // Predicated region
    $region10: #{encoder_with_fc.1} parent=1 // pred_check
      _
    $region11: #{encoder_with_fc.1} parent=1 // pred_check_branch
      %14 = sbr.rel (0) target = $region13
    $region12: #{encoder_with_fc.1} parent=1 // pred_region
      _
    $region13: #{encoder_with_fc.1} parent=1 // pred_fallthru
      _
    %v15 = vld [vmem:[%s0] sm:$0xff]
    %v16 = vld [vmem:[%s0 + $0x8] sm:$0xff]
    %v17 = vld [vmem:[%s0 + $0x10] sm:$0xff]
    %v18 = vld [vmem:[%s0 + $0x18] sm:$0xff]
    %v19 = vld [vmem:[%s0 + $0x20] sm:$0xff]
    %v20 = vld [vmem:[%s0 + $0x28] sm:$0xff]
    %v21 = vld [vmem:[%s0 + $0x30] sm:$0xff]
    %v22 = vld [vmem:[%s0 + $0x38] sm:$0xff]
    %v23 = vld [vmem:[%s0 + $0x40] sm:$0xff]
    %v24 = vld [vmem:[%s0 + $0x48] sm:$0xff]
    %v25 = vld [vmem:[%s0 + $0x50] sm:$0xff]
    %v26 = vld [vmem:[%s0 + $0x58] sm:$0xff]
    %v27 = vld [vmem:[%s0 + $0x60] sm:$0xff]
    %v28 = vld [vmem:[%s0 + $0x68] sm:$0xff]
    %v29 = vld [vmem:[%s0 + $0x70] sm:$0xff]
    %v30 = vld [vmem:[%s0 + $0x78] sm:$0xff]
    %v31 = vld [vmem:[%s0 + $0x80] sm:$0xff]
    %v32 = vld [vmem:[%s0 + $0x88] sm:$0xff]
    %v33 = vld [vmem:[%s0 + $0x90] sm:$0xff]
    %v34 = vld [vmem:[%s0 + $0x98] sm:$0xff]
    %v35 = vld [vmem:[%s0 + $0xa0] sm:$0xff]
    %v36 = vld [vmem:[%s0 + $0xa8] sm:$0xff]
    %v37 = vld [vmem:[%s0 + $0xb0] sm:$0xff]
    %v38 = vld [vmem:[%s0 + $0xb8] sm:$0xff]
    %v39 = vld [vmem:[%s0 + $0xc0] sm:$0xff]
    %v40 = vld [vmem:[%s0 + $0xc8] sm:$0xff]
    %v41 = vld [vmem:[%s0 + $0xd0] sm:$0xff]
    %v42 = vld [vmem:[%s0 + $0xd8] sm:$0xff]
    %v43 = vld [vmem:[%s0 + $0xe0] sm:$0xff]
    %v44 = vld [vmem:[%s0 + $0xe8] sm:$0xff]
    %v45 = vld [vmem:[%s0 + $0xf0] sm:$0xff]
    %v46 = vld [vmem:[%s0 + $0xf8] sm:$0xff]
    %v47 = vld [vmem:[%s1] sm:$0xff]
    %v48 = vld [vmem:[%s1 + $0x8] sm:$0xff]
    %v49 = vld [vmem:[%s1 + $0x10] sm:$0xff]
    %v50 = vld [vmem:[%s1 + $0x18] sm:$0xff]
    %v51 = vld [vmem:[%s1 + $0x20] sm:$0xff]
    %v52 = vld [vmem:[%s1 + $0x28] sm:$0xff]
    %v53 = vld [vmem:[%s1 + $0x30] sm:$0xff]
    %v54 = vld [vmem:[%s1 + $0x38] sm:$0xff]
    %v55 = vld [vmem:[%s1 + $0x40] sm:$0xff]
    %v56 = vld [vmem:[%s1 + $0x48] sm:$0xff]
    %v57 = vld [vmem:[%s1 + $0x50] sm:$0xff]
    %v58 = vld [vmem:[%s1 + $0x58] sm:$0xff]
    %v59 = vld [vmem:[%s1 + $0x60] sm:$0xff]
    %v60 = vld [vmem:[%s1 + $0x68] sm:$0xff]
    %v61 = vld [vmem:[%s1 + $0x70] sm:$0xff]
    %v62 = vld [vmem:[%s1 + $0x78] sm:$0xff]
    %v63 = vld [vmem:[%s2] sm:$0x1]
    %v65 = vlaneseq
    %v66 = vshrl.u32 %v65, 7
    %v67 = vsub.s32 0, %v66
    %v68 = vrot.slane %v63, %v67
    %vm70 = vcmask 523264
    %v72 = vsel %vm70, %v15, 0
    %v75 = vsel %vm70, %v16, 0
    %v78 = vsel %vm70, %v17, 0
    %v81 = vsel %vm70, %v18, 0
    %v84 = vsel %vm70, %v19, 0
    %v87 = vsel %vm70, %v20, 0
    %v90 = vsel %vm70, %v21, 0
    %v93 = vsel %vm70, %v22, 0
    %v96 = vsel %vm70, %v23, 0
    %v99 = vsel %vm70, %v24, 0
    %v102 = vsel %vm70, %v25, 0
    %v105 = vsel %vm70, %v26, 0
    %v108 = vsel %vm70, %v27, 0
    %v111 = vsel %vm70, %v28, 0
    %v114 = vsel %vm70, %v29, 0
    %v117 = vsel %vm70, %v30, 0
    %v120 = vsel %vm70, %v31, 0
    %v123 = vsel %vm70, %v32, 0
    %v126 = vsel %vm70, %v33, 0
    %v129 = vsel %vm70, %v34, 0
    %v132 = vsel %vm70, %v35, 0
    %v135 = vsel %vm70, %v36, 0
    %v138 = vsel %vm70, %v37, 0
    %v141 = vsel %vm70, %v38, 0
    %v144 = vsel %vm70, %v39, 0
    %v147 = vsel %vm70, %v40, 0
    %v150 = vsel %vm70, %v41, 0
    %v153 = vsel %vm70, %v42, 0
    %v156 = vsel %vm70, %v43, 0
    %v159 = vsel %vm70, %v44, 0
    %v162 = vsel %vm70, %v45, 0
    %v165 = vsel %vm70, %v46, 0
    %v168 = vsel %vm70, %v47, 0
    %v171 = vsel %vm70, %v48, 0
    %v174 = vsel %vm70, %v49, 0
    %v177 = vsel %vm70, %v50, 0
    %v180 = vsel %vm70, %v51, 0
    %v183 = vsel %vm70, %v52, 0
    %v186 = vsel %vm70, %v53, 0
    %v189 = vsel %vm70, %v54, 0
    %v192 = vsel %vm70, %v55, 0
    %v195 = vsel %vm70, %v56, 0
    %v198 = vsel %vm70, %v57, 0
    %v201 = vsel %vm70, %v58, 0
    %v204 = vsel %vm70, %v59, 0
    %v207 = vsel %vm70, %v60, 0
    %v210 = vsel %vm70, %v61, 0
    %v213 = vsel %vm70, %v62, 0
    %215 = vmatprep.subr.mxu0 0.0
    %v216 = vand.u32 %v213, 4294901760
    %217 = vmatpush1.xpose.msra.mxu0 %v216
    %218 = vmatprep.subr.mxu0 0.0
    %v219 = vand.u32 %v210, 4294901760
    %220 = vmatpush1.xpose.msra.mxu0 %v219
    %221 = vmatprep.subr.mxu0 0.0
    %v222 = vand.u32 %v207, 4294901760
    %223 = vmatpush1.xpose.msra.mxu0 %v222
    %224 = vmatprep.subr.mxu0 0.0
    %v225 = vand.u32 %v204, 4294901760
    %226 = vmatpush1.xpose.msra.mxu0 %v225
    %227 = vmatprep.subr.mxu0 0.0
    %v228 = vand.u32 %v201, 4294901760
    %229 = vmatpush1.xpose.msra.mxu0 %v228
    %230 = vmatprep.subr.mxu0 0.0
    %v231 = vand.u32 %v198, 4294901760
    %232 = vmatpush1.xpose.msra.mxu0 %v231
    %233 = vmatprep.subr.mxu0 0.0
    %v234 = vand.u32 %v195, 4294901760
    %235 = vmatpush1.xpose.msra.mxu0 %v234
    %236 = vmatprep.subr.mxu0 0.0
    %v237 = vand.u32 %v192, 4294901760
    %238 = vmatpush1.xpose.msra.mxu0 %v237
    %239 = vmatprep.subr.mxu0 0.0
    %v240 = vand.u32 %v189, 4294901760
    %241 = vmatpush1.xpose.msra.mxu0 %v240
    %242 = vmatprep.subr.mxu0 0.0
    %v243 = vand.u32 %v186, 4294901760
    %244 = vmatpush1.xpose.msra.mxu0 %v243
    %245 = vmatprep.subr.mxu0 0.0
    %v246 = vand.u32 %v183, 4294901760
    %247 = vmatpush1.xpose.msra.mxu0 %v246
    %248 = vmatprep.subr.mxu0 0.0
    %v249 = vand.u32 %v180, 4294901760
    %250 = vmatpush1.xpose.msra.mxu0 %v249
    %251 = vmatprep.subr.mxu0 0.0
    %v252 = vand.u32 %v177, 4294901760
    %253 = vmatpush1.xpose.msra.mxu0 %v252
    %254 = vmatprep.subr.mxu0 0.0
    %v255 = vand.u32 %v174, 4294901760
    %256 = vmatpush1.xpose.msra.mxu0 %v255
    %257 = vmatprep.subr.mxu0 0.0
    %v258 = vand.u32 %v171, 4294901760
    %259 = vmatpush1.xpose.msra.mxu0 %v258
    %260 = vmatprep.subr.mxu0 0.0
    %v261 = vand.u32 %v168, 4294901760
    %262 = vmatpush1.xpose.msra.mxu0 %v261
    %263 = vmatprep.subr.mxu0 0.0
    %264 = vmatpush2.xpose.msra.mxu0 0.0
    %265 = vmatprep.subr.mxu0 0.0
    %266 = vmatpush2.xpose.msra.mxu0 0.0
    %267 = vmatprep.subr.mxu0 0.0
    %268 = vmatpush2.xpose.msra.mxu0 0.0
    %269 = vmatprep.subr.mxu0 0.0
    %270 = vmatpush2.xpose.msra.mxu0 0.0
    %271 = vmatprep.subr.mxu0 0.0
    %272 = vmatpush2.xpose.msra.mxu0 0.0
    %273 = vmatprep.subr.mxu0 0.0
    %274 = vmatpush2.xpose.msra.mxu0 0.0
    %275 = vmatprep.subr.mxu0 0.0
    %276 = vmatpush2.xpose.msra.mxu0 0.0
    %277 = vmatprep.subr.mxu0 0.0
    %278 = vmatpush2.xpose.msra.mxu0 0.0
    %279 = vmatprep.subr.mxu0 0.0
    %280 = vmatpush2.xpose.msra.mxu0 0.0
    %281 = vmatprep.subr.mxu0 0.0
    %282 = vmatpush2.xpose.msra.mxu0 0.0
    %283 = vmatprep.subr.mxu0 0.0
    %284 = vmatpush2.xpose.msra.mxu0 0.0
    %285 = vmatprep.subr.mxu0 0.0
    %286 = vmatpush2.xpose.msra.mxu0 0.0
    %287 = vmatprep.subr.mxu0 0.0
    %288 = vmatpush2.xpose.msra.mxu0 0.0
    %289 = vmatprep.subr.mxu0 0.0
    %290 = vmatpush2.xpose.msra.mxu0 0.0
    %291 = vmatprep.subr.mxu0 0.0
    %292 = vmatpush2.xpose.msra.mxu0 0.0
    %293 = vmatprep.subr.mxu0 0.0
    %294 = vmatpush2.xpose.msra.mxu0 0.0
    %295 = vmatprep.mubr.f32.mxu0 0.0
    %v296 = vand.u32 %v72, 4294901760
    %v297 = vsub.f32 %v72, %v296
    %v298 = vand.u32 %v297, 4294901760
    %v299 = vsub.f32 %v297, %v298
    %v300 = vand.u32 %v299, 4294901760
    %301 = vmatmul.mubr.f32.gmra.mxu0 %v300
    %v302 = vpop.f32.mrf.mxu0
    %v303 = vadd.f32 %v68, %v302
    %v304 = vpop.f32.mrf.mxu0
    %305 = vmatprep.mubr.f32.mxu0 0.0
    %v306 = vand.u32 %v75, 4294901760
    %v307 = vsub.f32 %v75, %v306
    %v308 = vand.u32 %v307, 4294901760
    %v309 = vsub.f32 %v307, %v308
    %v310 = vand.u32 %v309, 4294901760
    %311 = vmatmul.mubr.f32.gmra.mxu0 %v310
    %v312 = vpop.f32.mrf.mxu0
    %v313 = vadd.f32 %v68, %v312
    %v314 = vpop.f32.mrf.mxu0
    %315 = vmatprep.mubr.f32.mxu0 0.0
    %v316 = vand.u32 %v78, 4294901760
    %v317 = vsub.f32 %v78, %v316
    %v318 = vand.u32 %v317, 4294901760
    %v319 = vsub.f32 %v317, %v318
    %v320 = vand.u32 %v319, 4294901760
    %321 = vmatmul.mubr.f32.gmra.mxu0 %v320
    %v322 = vpop.f32.mrf.mxu0
    %v323 = vadd.f32 %v68, %v322
    %v324 = vpop.f32.mrf.mxu0
    %325 = vmatprep.mubr.f32.mxu0 0.0
    %v326 = vand.u32 %v81, 4294901760
    %v327 = vsub.f32 %v81, %v326
    %v328 = vand.u32 %v327, 4294901760
    %v329 = vsub.f32 %v327, %v328
    %v330 = vand.u32 %v329, 4294901760
    %331 = vmatmul.mubr.f32.gmra.mxu0 %v330
    %v332 = vpop.f32.mrf.mxu0
    %v333 = vadd.f32 %v68, %v332
    %v334 = vpop.f32.mrf.mxu0
    %335 = vmatprep.mubr.f32.mxu0 0.0
    %v336 = vand.u32 %v84, 4294901760
    %v337 = vsub.f32 %v84, %v336
    %v338 = vand.u32 %v337, 4294901760
    %v339 = vsub.f32 %v337, %v338
    %v340 = vand.u32 %v339, 4294901760
    %341 = vmatmul.mubr.f32.gmra.mxu0 %v340
    %v342 = vpop.f32.mrf.mxu0
    %v343 = vadd.f32 %v68, %v342
    %v344 = vpop.f32.mrf.mxu0
    %345 = vmatprep.mubr.f32.mxu0 0.0
    %v346 = vand.u32 %v87, 4294901760
    %v347 = vsub.f32 %v87, %v346
    %v348 = vand.u32 %v347, 4294901760
    %v349 = vsub.f32 %v347, %v348
    %v350 = vand.u32 %v349, 4294901760
    %351 = vmatmul.mubr.f32.gmra.mxu0 %v350
    %v352 = vpop.f32.mrf.mxu0
    %v353 = vadd.f32 %v68, %v352
    %v354 = vpop.f32.mrf.mxu0
    %355 = vmatprep.mubr.f32.mxu0 0.0
    %v356 = vand.u32 %v90, 4294901760
    %v357 = vsub.f32 %v90, %v356
    %v358 = vand.u32 %v357, 4294901760
    %v359 = vsub.f32 %v357, %v358
    %v360 = vand.u32 %v359, 4294901760
    %361 = vmatmul.mubr.f32.gmra.mxu0 %v360
    %v362 = vpop.f32.mrf.mxu0
    %v363 = vadd.f32 %v68, %v362
    %v364 = vpop.f32.mrf.mxu0
    %365 = vmatprep.mubr.f32.mxu0 0.0
    %v366 = vand.u32 %v93, 4294901760
    %v367 = vsub.f32 %v93, %v366
    %v368 = vand.u32 %v367, 4294901760
    %v369 = vsub.f32 %v367, %v368
    %v370 = vand.u32 %v369, 4294901760
    %371 = vmatmul.mubr.f32.gmra.mxu0 %v370
    %v372 = vpop.f32.mrf.mxu0
    %v373 = vadd.f32 %v68, %v372
    %v374 = vpop.f32.mrf.mxu0
    %375 = vmatprep.mubr.f32.mxu0 0.0
    %v376 = vand.u32 %v96, 4294901760
    %v377 = vsub.f32 %v96, %v376
    %v378 = vand.u32 %v377, 4294901760
    %v379 = vsub.f32 %v377, %v378
    %v380 = vand.u32 %v379, 4294901760
    %381 = vmatmul.mubr.f32.gmra.mxu0 %v380
    %v382 = vpop.f32.mrf.mxu0
    %v383 = vadd.f32 %v68, %v382
    %v384 = vpop.f32.mrf.mxu0
    %385 = vmatprep.mubr.f32.mxu0 0.0
    %v386 = vand.u32 %v99, 4294901760
    %v387 = vsub.f32 %v99, %v386
    %v388 = vand.u32 %v387, 4294901760
    %v389 = vsub.f32 %v387, %v388
    %v390 = vand.u32 %v389, 4294901760
    %391 = vmatmul.mubr.f32.gmra.mxu0 %v390
    %v392 = vpop.f32.mrf.mxu0
    %v393 = vadd.f32 %v68, %v392
    %v394 = vpop.f32.mrf.mxu0
    %395 = vmatprep.mubr.f32.mxu0 0.0
    %v396 = vand.u32 %v102, 4294901760
    %v397 = vsub.f32 %v102, %v396
    %v398 = vand.u32 %v397, 4294901760
    %v399 = vsub.f32 %v397, %v398
    %v400 = vand.u32 %v399, 4294901760
    %401 = vmatmul.mubr.f32.gmra.mxu0 %v400
    %v402 = vpop.f32.mrf.mxu0
    %v403 = vadd.f32 %v68, %v402
    %v404 = vpop.f32.mrf.mxu0
    %405 = vmatprep.mubr.f32.mxu0 0.0
    %v406 = vand.u32 %v105, 4294901760
    %v407 = vsub.f32 %v105, %v406
    %v408 = vand.u32 %v407, 4294901760
    %v409 = vsub.f32 %v407, %v408
    %v410 = vand.u32 %v409, 4294901760
    %411 = vmatmul.mubr.f32.gmra.mxu0 %v410
    %v412 = vpop.f32.mrf.mxu0
    %v413 = vadd.f32 %v68, %v412
    %v414 = vpop.f32.mrf.mxu0
    %415 = vmatprep.mubr.f32.mxu0 0.0
    %v416 = vand.u32 %v108, 4294901760
    %v417 = vsub.f32 %v108, %v416
    %v418 = vand.u32 %v417, 4294901760
    %v419 = vsub.f32 %v417, %v418
    %v420 = vand.u32 %v419, 4294901760
    %421 = vmatmul.mubr.f32.gmra.mxu0 %v420
    %v422 = vpop.f32.mrf.mxu0
    %v423 = vadd.f32 %v68, %v422
    %v424 = vpop.f32.mrf.mxu0
    %425 = vmatprep.mubr.f32.mxu0 0.0
    %v426 = vand.u32 %v111, 4294901760
    %v427 = vsub.f32 %v111, %v426
    %v428 = vand.u32 %v427, 4294901760
    %v429 = vsub.f32 %v427, %v428
    %v430 = vand.u32 %v429, 4294901760
    %431 = vmatmul.mubr.f32.gmra.mxu0 %v430
    %v432 = vpop.f32.mrf.mxu0
    %v433 = vadd.f32 %v68, %v432
    %v434 = vpop.f32.mrf.mxu0
    %435 = vmatprep.mubr.f32.mxu0 0.0
    %v436 = vand.u32 %v114, 4294901760
    %v437 = vsub.f32 %v114, %v436
    %v438 = vand.u32 %v437, 4294901760
    %v439 = vsub.f32 %v437, %v438
    %v440 = vand.u32 %v439, 4294901760
    %441 = vmatmul.mubr.f32.gmra.mxu0 %v440
    %v442 = vpop.f32.mrf.mxu0
    %v443 = vadd.f32 %v68, %v442
    %v444 = vpop.f32.mrf.mxu0
    %445 = vmatprep.mubr.f32.mxu0 0.0
    %v446 = vand.u32 %v117, 4294901760
    %v447 = vsub.f32 %v117, %v446
    %v448 = vand.u32 %v447, 4294901760
    %v449 = vsub.f32 %v447, %v448
    %v450 = vand.u32 %v449, 4294901760
    %451 = vmatmul.mubr.f32.gmra.mxu0 %v450
    %v452 = vpop.f32.mrf.mxu0
    %v453 = vadd.f32 %v68, %v452
    %v454 = vpop.f32.mrf.mxu0
    %455 = vmatprep.mubr.f32.mxu0 0.0
    %v456 = vand.u32 %v120, 4294901760
    %v457 = vsub.f32 %v120, %v456
    %v458 = vand.u32 %v457, 4294901760
    %v459 = vsub.f32 %v457, %v458
    %v460 = vand.u32 %v459, 4294901760
    %461 = vmatmul.mubr.f32.gmra.mxu0 %v460
    %v462 = vpop.f32.mrf.mxu0
    %v463 = vadd.f32 %v68, %v462
    %v464 = vpop.f32.mrf.mxu0
    %465 = vmatprep.mubr.f32.mxu0 0.0
    %v466 = vand.u32 %v123, 4294901760
    %v467 = vsub.f32 %v123, %v466
    %v468 = vand.u32 %v467, 4294901760
    %v469 = vsub.f32 %v467, %v468
    %v470 = vand.u32 %v469, 4294901760
    %471 = vmatmul.mubr.f32.gmra.mxu0 %v470
    %v472 = vpop.f32.mrf.mxu0
    %v473 = vadd.f32 %v68, %v472
    %v474 = vpop.f32.mrf.mxu0
    %475 = vmatprep.mubr.f32.mxu0 0.0
    %v476 = vand.u32 %v126, 4294901760
    %v477 = vsub.f32 %v126, %v476
    %v478 = vand.u32 %v477, 4294901760
    %v479 = vsub.f32 %v477, %v478
    %v480 = vand.u32 %v479, 4294901760
    %481 = vmatmul.mubr.f32.gmra.mxu0 %v480
    %v482 = vpop.f32.mrf.mxu0
    %v483 = vadd.f32 %v68, %v482
    %v484 = vpop.f32.mrf.mxu0
    %485 = vmatprep.mubr.f32.mxu0 0.0
    %v486 = vand.u32 %v129, 4294901760
    %v487 = vsub.f32 %v129, %v486
    %v488 = vand.u32 %v487, 4294901760
    %v489 = vsub.f32 %v487, %v488
    %v490 = vand.u32 %v489, 4294901760
    %491 = vmatmul.mubr.f32.gmra.mxu0 %v490
    %v492 = vpop.f32.mrf.mxu0
    %v493 = vadd.f32 %v68, %v492
    %v494 = vpop.f32.mrf.mxu0
    %495 = vmatprep.mubr.f32.mxu0 0.0
    %v496 = vand.u32 %v132, 4294901760
    %v497 = vsub.f32 %v132, %v496
    %v498 = vand.u32 %v497, 4294901760
    %v499 = vsub.f32 %v497, %v498
    %v500 = vand.u32 %v499, 4294901760
    %501 = vmatmul.mubr.f32.gmra.mxu0 %v500
    %v502 = vpop.f32.mrf.mxu0
    %v503 = vadd.f32 %v68, %v502
    %v504 = vpop.f32.mrf.mxu0
    %505 = vmatprep.mubr.f32.mxu0 0.0
    %v506 = vand.u32 %v135, 4294901760
    %v507 = vsub.f32 %v135, %v506
    %v508 = vand.u32 %v507, 4294901760
    %v509 = vsub.f32 %v507, %v508
    %v510 = vand.u32 %v509, 4294901760
    %511 = vmatmul.mubr.f32.gmra.mxu0 %v510
    %v512 = vpop.f32.mrf.mxu0
    %v513 = vadd.f32 %v68, %v512
    %v514 = vpop.f32.mrf.mxu0
    %515 = vmatprep.mubr.f32.mxu0 0.0
    %v516 = vand.u32 %v138, 4294901760
    %v517 = vsub.f32 %v138, %v516
    %v518 = vand.u32 %v517, 4294901760
    %v519 = vsub.f32 %v517, %v518
    %v520 = vand.u32 %v519, 4294901760
    %521 = vmatmul.mubr.f32.gmra.mxu0 %v520
    %v522 = vpop.f32.mrf.mxu0
    %v523 = vadd.f32 %v68, %v522
    %v524 = vpop.f32.mrf.mxu0
    %525 = vmatprep.mubr.f32.mxu0 0.0
    %v526 = vand.u32 %v141, 4294901760
    %v527 = vsub.f32 %v141, %v526
    %v528 = vand.u32 %v527, 4294901760
    %v529 = vsub.f32 %v527, %v528
    %v530 = vand.u32 %v529, 4294901760
    %531 = vmatmul.mubr.f32.gmra.mxu0 %v530
    %v532 = vpop.f32.mrf.mxu0
    %v533 = vadd.f32 %v68, %v532
    %v534 = vpop.f32.mrf.mxu0
    %535 = vmatprep.mubr.f32.mxu0 0.0
    %v536 = vand.u32 %v144, 4294901760
    %v537 = vsub.f32 %v144, %v536
    %v538 = vand.u32 %v537, 4294901760
    %v539 = vsub.f32 %v537, %v538
    %v540 = vand.u32 %v539, 4294901760
    %541 = vmatmul.mubr.f32.gmra.mxu0 %v540
    %v542 = vpop.f32.mrf.mxu0
    %v543 = vadd.f32 %v68, %v542
    %v544 = vpop.f32.mrf.mxu0
    %545 = vmatprep.mubr.f32.mxu0 0.0
    %v546 = vand.u32 %v147, 4294901760
    %v547 = vsub.f32 %v147, %v546
    %v548 = vand.u32 %v547, 4294901760
    %v549 = vsub.f32 %v547, %v548
    %v550 = vand.u32 %v549, 4294901760
    %551 = vmatmul.mubr.f32.gmra.mxu0 %v550
    %v552 = vpop.f32.mrf.mxu0
    %v553 = vadd.f32 %v68, %v552
    %v554 = vpop.f32.mrf.mxu0
    %555 = vmatprep.mubr.f32.mxu0 0.0
    %v556 = vand.u32 %v150, 4294901760
    %v557 = vsub.f32 %v150, %v556
    %v558 = vand.u32 %v557, 4294901760
    %v559 = vsub.f32 %v557, %v558
    %v560 = vand.u32 %v559, 4294901760
    %561 = vmatmul.mubr.f32.gmra.mxu0 %v560
    %v562 = vpop.f32.mrf.mxu0
    %v563 = vadd.f32 %v68, %v562
    %v564 = vpop.f32.mrf.mxu0
    %565 = vmatprep.mubr.f32.mxu0 0.0
    %v566 = vand.u32 %v153, 4294901760
    %v567 = vsub.f32 %v153, %v566
    %v568 = vand.u32 %v567, 4294901760
    %v569 = vsub.f32 %v567, %v568
    %v570 = vand.u32 %v569, 4294901760
    %571 = vmatmul.mubr.f32.gmra.mxu0 %v570
    %v572 = vpop.f32.mrf.mxu0
    %v573 = vadd.f32 %v68, %v572
    %v574 = vpop.f32.mrf.mxu0
    %575 = vmatprep.mubr.f32.mxu0 0.0
    %v576 = vand.u32 %v156, 4294901760
    %v577 = vsub.f32 %v156, %v576
    %v578 = vand.u32 %v577, 4294901760
    %v579 = vsub.f32 %v577, %v578
    %v580 = vand.u32 %v579, 4294901760
    %581 = vmatmul.mubr.f32.gmra.mxu0 %v580
    %v582 = vpop.f32.mrf.mxu0
    %v583 = vadd.f32 %v68, %v582
    %v584 = vpop.f32.mrf.mxu0
    %585 = vmatprep.mubr.f32.mxu0 0.0
    %v586 = vand.u32 %v159, 4294901760
    %v587 = vsub.f32 %v159, %v586
    %v588 = vand.u32 %v587, 4294901760
    %v589 = vsub.f32 %v587, %v588
    %v590 = vand.u32 %v589, 4294901760
    %591 = vmatmul.mubr.f32.gmra.mxu0 %v590
    %v592 = vpop.f32.mrf.mxu0
    %v593 = vadd.f32 %v68, %v592
    %v594 = vpop.f32.mrf.mxu0
    %595 = vmatprep.mubr.f32.mxu0 0.0
    %v596 = vand.u32 %v162, 4294901760
    %v597 = vsub.f32 %v162, %v596
    %v598 = vand.u32 %v597, 4294901760
    %v599 = vsub.f32 %v597, %v598
    %v600 = vand.u32 %v599, 4294901760
    %601 = vmatmul.mubr.f32.gmra.mxu0 %v600
    %v602 = vpop.f32.mrf.mxu0
    %v603 = vadd.f32 %v68, %v602
    %v604 = vpop.f32.mrf.mxu0
    %605 = vmatprep.mubr.f32.mxu0 0.0
    %v606 = vand.u32 %v165, 4294901760
    %v607 = vsub.f32 %v165, %v606
    %v608 = vand.u32 %v607, 4294901760
    %v609 = vsub.f32 %v607, %v608
    %v610 = vand.u32 %v609, 4294901760
    %611 = vmatmul.mubr.f32.gmra.mxu0 %v610
    %v612 = vpop.f32.mrf.mxu0
    %v613 = vadd.f32 %v68, %v612
    %v614 = vpop.f32.mrf.mxu0
    %615 = vdwg.mxu0
    %616 = vmatprep.subr.mxu0 0.0
    %v617 = vand.u32 %v213, 4294901760
    %v618 = vsub.f32 %v213, %v617
    %v619 = vand.u32 %v618, 4294901760
    %v620 = vsub.f32 %v618, %v619
    %v621 = vand.u32 %v620, 4294901760
    %622 = vmatpush1.xpose.msra.mxu0 %v621
    %623 = vmatprep.subr.mxu0 0.0
    %v624 = vand.u32 %v210, 4294901760
    %v625 = vsub.f32 %v210, %v624
    %v626 = vand.u32 %v625, 4294901760
    %v627 = vsub.f32 %v625, %v626
    %v628 = vand.u32 %v627, 4294901760
    %629 = vmatpush1.xpose.msra.mxu0 %v628
    %630 = vmatprep.subr.mxu0 0.0
    %v631 = vand.u32 %v207, 4294901760
    %v632 = vsub.f32 %v207, %v631
    %v633 = vand.u32 %v632, 4294901760
    %v634 = vsub.f32 %v632, %v633
    %v635 = vand.u32 %v634, 4294901760
    %636 = vmatpush1.xpose.msra.mxu0 %v635
    %637 = vmatprep.subr.mxu0 0.0
    %v638 = vand.u32 %v204, 4294901760
    %v639 = vsub.f32 %v204, %v638
    %v640 = vand.u32 %v639, 4294901760
    %v641 = vsub.f32 %v639, %v640
    %v642 = vand.u32 %v641, 4294901760
    %643 = vmatpush1.xpose.msra.mxu0 %v642
    %644 = vmatprep.subr.mxu0 0.0
    %v645 = vand.u32 %v201, 4294901760
    %v646 = vsub.f32 %v201, %v645
    %v647 = vand.u32 %v646, 4294901760
    %v648 = vsub.f32 %v646, %v647
    %v649 = vand.u32 %v648, 4294901760
    %650 = vmatpush1.xpose.msra.mxu0 %v649
    %651 = vmatprep.subr.mxu0 0.0
    %v652 = vand.u32 %v198, 4294901760
    %v653 = vsub.f32 %v198, %v652
    %v654 = vand.u32 %v653, 4294901760
    %v655 = vsub.f32 %v653, %v654
    %v656 = vand.u32 %v655, 4294901760
    %657 = vmatpush1.xpose.msra.mxu0 %v656
    %658 = vmatprep.subr.mxu0 0.0
    %v659 = vand.u32 %v195, 4294901760
    %v660 = vsub.f32 %v195, %v659
    %v661 = vand.u32 %v660, 4294901760
    %v662 = vsub.f32 %v660, %v661
    %v663 = vand.u32 %v662, 4294901760
    %664 = vmatpush1.xpose.msra.mxu0 %v663
    %665 = vmatprep.subr.mxu0 0.0
    %v666 = vand.u32 %v192, 4294901760
    %v667 = vsub.f32 %v192, %v666
    %v668 = vand.u32 %v667, 4294901760
    %v669 = vsub.f32 %v667, %v668
    %v670 = vand.u32 %v669, 4294901760
    %671 = vmatpush1.xpose.msra.mxu0 %v670
    %672 = vmatprep.subr.mxu0 0.0
    %v673 = vand.u32 %v189, 4294901760
    %v674 = vsub.f32 %v189, %v673
    %v675 = vand.u32 %v674, 4294901760
    %v676 = vsub.f32 %v674, %v675
    %v677 = vand.u32 %v676, 4294901760
    %678 = vmatpush1.xpose.msra.mxu0 %v677
    %679 = vmatprep.subr.mxu0 0.0
    %v680 = vand.u32 %v186, 4294901760
    %v681 = vsub.f32 %v186, %v680
    %v682 = vand.u32 %v681, 4294901760
    %v683 = vsub.f32 %v681, %v682
    %v684 = vand.u32 %v683, 4294901760
    %685 = vmatpush1.xpose.msra.mxu0 %v684
    %686 = vmatprep.subr.mxu0 0.0
    %v687 = vand.u32 %v183, 4294901760
    %v688 = vsub.f32 %v183, %v687
    %v689 = vand.u32 %v688, 4294901760
    %v690 = vsub.f32 %v688, %v689
    %v691 = vand.u32 %v690, 4294901760
    %692 = vmatpush1.xpose.msra.mxu0 %v691
    %693 = vmatprep.subr.mxu0 0.0
    %v694 = vand.u32 %v180, 4294901760
    %v695 = vsub.f32 %v180, %v694
    %v696 = vand.u32 %v695, 4294901760
    %v697 = vsub.f32 %v695, %v696
    %v698 = vand.u32 %v697, 4294901760
    %699 = vmatpush1.xpose.msra.mxu0 %v698
    %700 = vmatprep.subr.mxu0 0.0
    %v701 = vand.u32 %v177, 4294901760
    %v702 = vsub.f32 %v177, %v701
    %v703 = vand.u32 %v702, 4294901760
    %v704 = vsub.f32 %v702, %v703
    %v705 = vand.u32 %v704, 4294901760
    %706 = vmatpush1.xpose.msra.mxu0 %v705
    %707 = vmatprep.subr.mxu0 0.0
    %v708 = vand.u32 %v174, 4294901760
    %v709 = vsub.f32 %v174, %v708
    %v710 = vand.u32 %v709, 4294901760
    %v711 = vsub.f32 %v709, %v710
    %v712 = vand.u32 %v711, 4294901760
    %713 = vmatpush1.xpose.msra.mxu0 %v712
    %714 = vmatprep.subr.mxu0 0.0
    %v715 = vand.u32 %v171, 4294901760
    %v716 = vsub.f32 %v171, %v715
    %v717 = vand.u32 %v716, 4294901760
    %v718 = vsub.f32 %v716, %v717
    %v719 = vand.u32 %v718, 4294901760
    %720 = vmatpush1.xpose.msra.mxu0 %v719
    %721 = vmatprep.subr.mxu0 0.0
    %v722 = vand.u32 %v168, 4294901760
    %v723 = vsub.f32 %v168, %v722
    %v724 = vand.u32 %v723, 4294901760
    %v725 = vsub.f32 %v723, %v724
    %v726 = vand.u32 %v725, 4294901760
    %727 = vmatpush1.xpose.msra.mxu0 %v726
    %728 = vmatprep.subr.mxu0 0.0
    %729 = vmatpush2.xpose.msra.mxu0 0.0
    %730 = vmatprep.subr.mxu0 0.0
    %731 = vmatpush2.xpose.msra.mxu0 0.0
    %732 = vmatprep.subr.mxu0 0.0
    %733 = vmatpush2.xpose.msra.mxu0 0.0
    %734 = vmatprep.subr.mxu0 0.0
    %735 = vmatpush2.xpose.msra.mxu0 0.0
    %736 = vmatprep.subr.mxu0 0.0
    %737 = vmatpush2.xpose.msra.mxu0 0.0
    %738 = vmatprep.subr.mxu0 0.0
    %739 = vmatpush2.xpose.msra.mxu0 0.0
    %740 = vmatprep.subr.mxu0 0.0
    %741 = vmatpush2.xpose.msra.mxu0 0.0
    %742 = vmatprep.subr.mxu0 0.0
    %743 = vmatpush2.xpose.msra.mxu0 0.0
    %744 = vmatprep.subr.mxu0 0.0
    %745 = vmatpush2.xpose.msra.mxu0 0.0
    %746 = vmatprep.subr.mxu0 0.0
    %747 = vmatpush2.xpose.msra.mxu0 0.0
    %748 = vmatprep.subr.mxu0 0.0
    %749 = vmatpush2.xpose.msra.mxu0 0.0
    %750 = vmatprep.subr.mxu0 0.0
    %751 = vmatpush2.xpose.msra.mxu0 0.0
    %752 = vmatprep.subr.mxu0 0.0
    %753 = vmatpush2.xpose.msra.mxu0 0.0
    %754 = vmatprep.subr.mxu0 0.0
    %755 = vmatpush2.xpose.msra.mxu0 0.0
    %756 = vmatprep.subr.mxu0 0.0
    %757 = vmatpush2.xpose.msra.mxu0 0.0
    %758 = vmatprep.subr.mxu0 0.0
    %759 = vmatpush2.xpose.msra.mxu0 0.0
    %760 = vmatprep.mubr.f32.mxu0 0.0
    %v761 = vand.u32 %v72, 4294901760
    %762 = vmatmul.mubr.f32.gmra.mxu0 %v761
    %v763 = vpop.f32.mrf.mxu0
    %v764 = vadd.f32 %v303, %v763
    %v765 = vpop.f32.mrf.mxu0
    %766 = vmatprep.mubr.f32.mxu0 0.0
    %v767 = vand.u32 %v75, 4294901760
    %768 = vmatmul.mubr.f32.gmra.mxu0 %v767
    %v769 = vpop.f32.mrf.mxu0
    %v770 = vadd.f32 %v313, %v769
    %v771 = vpop.f32.mrf.mxu0
    %772 = vmatprep.mubr.f32.mxu0 0.0
    %v773 = vand.u32 %v78, 4294901760
    %774 = vmatmul.mubr.f32.gmra.mxu0 %v773
    %v775 = vpop.f32.mrf.mxu0
    %v776 = vadd.f32 %v323, %v775
    %v777 = vpop.f32.mrf.mxu0
    %778 = vmatprep.mubr.f32.mxu0 0.0
    %v779 = vand.u32 %v81, 4294901760
    %780 = vmatmul.mubr.f32.gmra.mxu0 %v779
    %v781 = vpop.f32.mrf.mxu0
    %v782 = vadd.f32 %v333, %v781
    %v783 = vpop.f32.mrf.mxu0
    %784 = vmatprep.mubr.f32.mxu0 0.0
    %v785 = vand.u32 %v84, 4294901760
    %786 = vmatmul.mubr.f32.gmra.mxu0 %v785
    %v787 = vpop.f32.mrf.mxu0
    %v788 = vadd.f32 %v343, %v787
    %v789 = vpop.f32.mrf.mxu0
    %790 = vmatprep.mubr.f32.mxu0 0.0
    %v791 = vand.u32 %v87, 4294901760
    %792 = vmatmul.mubr.f32.gmra.mxu0 %v791
    %v793 = vpop.f32.mrf.mxu0
    %v794 = vadd.f32 %v353, %v793
    %v795 = vpop.f32.mrf.mxu0
    %796 = vmatprep.mubr.f32.mxu0 0.0
    %v797 = vand.u32 %v90, 4294901760
    %798 = vmatmul.mubr.f32.gmra.mxu0 %v797
    %v799 = vpop.f32.mrf.mxu0
    %v800 = vadd.f32 %v363, %v799
    %v801 = vpop.f32.mrf.mxu0
    %802 = vmatprep.mubr.f32.mxu0 0.0
    %v803 = vand.u32 %v93, 4294901760
    %804 = vmatmul.mubr.f32.gmra.mxu0 %v803
    %v805 = vpop.f32.mrf.mxu0
    %v806 = vadd.f32 %v373, %v805
    %v807 = vpop.f32.mrf.mxu0
    %808 = vmatprep.mubr.f32.mxu0 0.0
    %v809 = vand.u32 %v96, 4294901760
    %810 = vmatmul.mubr.f32.gmra.mxu0 %v809
    %v811 = vpop.f32.mrf.mxu0
    %v812 = vadd.f32 %v383, %v811
    %v813 = vpop.f32.mrf.mxu0
    %814 = vmatprep.mubr.f32.mxu0 0.0
    %v815 = vand.u32 %v99, 4294901760
    %816 = vmatmul.mubr.f32.gmra.mxu0 %v815
    %v817 = vpop.f32.mrf.mxu0
    %v818 = vadd.f32 %v393, %v817
    %v819 = vpop.f32.mrf.mxu0
    %820 = vmatprep.mubr.f32.mxu0 0.0
    %v821 = vand.u32 %v102, 4294901760
    %822 = vmatmul.mubr.f32.gmra.mxu0 %v821
    %v823 = vpop.f32.mrf.mxu0
    %v824 = vadd.f32 %v403, %v823
    %v825 = vpop.f32.mrf.mxu0
    %826 = vmatprep.mubr.f32.mxu0 0.0
    %v827 = vand.u32 %v105, 4294901760
    %828 = vmatmul.mubr.f32.gmra.mxu0 %v827
    %v829 = vpop.f32.mrf.mxu0
    %v830 = vadd.f32 %v413, %v829
    %v831 = vpop.f32.mrf.mxu0
    %832 = vmatprep.mubr.f32.mxu0 0.0
    %v833 = vand.u32 %v108, 4294901760
    %834 = vmatmul.mubr.f32.gmra.mxu0 %v833
    %v835 = vpop.f32.mrf.mxu0
    %v836 = vadd.f32 %v423, %v835
    %v837 = vpop.f32.mrf.mxu0
    %838 = vmatprep.mubr.f32.mxu0 0.0
    %v839 = vand.u32 %v111, 4294901760
    %840 = vmatmul.mubr.f32.gmra.mxu0 %v839
    %v841 = vpop.f32.mrf.mxu0
    %v842 = vadd.f32 %v433, %v841
    %v843 = vpop.f32.mrf.mxu0
    %844 = vmatprep.mubr.f32.mxu0 0.0
    %v845 = vand.u32 %v114, 4294901760
    %846 = vmatmul.mubr.f32.gmra.mxu0 %v845
    %v847 = vpop.f32.mrf.mxu0
    %v848 = vadd.f32 %v443, %v847
    %v849 = vpop.f32.mrf.mxu0
    %850 = vmatprep.mubr.f32.mxu0 0.0
    %v851 = vand.u32 %v117, 4294901760
    %852 = vmatmul.mubr.f32.gmra.mxu0 %v851
    %v853 = vpop.f32.mrf.mxu0
    %v854 = vadd.f32 %v453, %v853
    %v855 = vpop.f32.mrf.mxu0
    %856 = vmatprep.mubr.f32.mxu0 0.0
    %v857 = vand.u32 %v120, 4294901760
    %858 = vmatmul.mubr.f32.gmra.mxu0 %v857
    %v859 = vpop.f32.mrf.mxu0
    %v860 = vadd.f32 %v463, %v859
    %v861 = vpop.f32.mrf.mxu0
    %862 = vmatprep.mubr.f32.mxu0 0.0
    %v863 = vand.u32 %v123, 4294901760
    %864 = vmatmul.mubr.f32.gmra.mxu0 %v863
    %v865 = vpop.f32.mrf.mxu0
    %v866 = vadd.f32 %v473, %v865
    %v867 = vpop.f32.mrf.mxu0
    %868 = vmatprep.mubr.f32.mxu0 0.0
    %v869 = vand.u32 %v126, 4294901760
    %870 = vmatmul.mubr.f32.gmra.mxu0 %v869
    %v871 = vpop.f32.mrf.mxu0
    %v872 = vadd.f32 %v483, %v871
    %v873 = vpop.f32.mrf.mxu0
    %874 = vmatprep.mubr.f32.mxu0 0.0
    %v875 = vand.u32 %v129, 4294901760
    %876 = vmatmul.mubr.f32.gmra.mxu0 %v875
    %v877 = vpop.f32.mrf.mxu0
    %v878 = vadd.f32 %v493, %v877
    %v879 = vpop.f32.mrf.mxu0
    %880 = vmatprep.mubr.f32.mxu0 0.0
    %v881 = vand.u32 %v132, 4294901760
    %882 = vmatmul.mubr.f32.gmra.mxu0 %v881
    %v883 = vpop.f32.mrf.mxu0
    %v884 = vadd.f32 %v503, %v883
    %v885 = vpop.f32.mrf.mxu0
    %886 = vmatprep.mubr.f32.mxu0 0.0
    %v887 = vand.u32 %v135, 4294901760
    %888 = vmatmul.mubr.f32.gmra.mxu0 %v887
    %v889 = vpop.f32.mrf.mxu0
    %v890 = vadd.f32 %v513, %v889
    %v891 = vpop.f32.mrf.mxu0
    %892 = vmatprep.mubr.f32.mxu0 0.0
    %v893 = vand.u32 %v138, 4294901760
    %894 = vmatmul.mubr.f32.gmra.mxu0 %v893
    %v895 = vpop.f32.mrf.mxu0
    %v896 = vadd.f32 %v523, %v895
    %v897 = vpop.f32.mrf.mxu0
    %898 = vmatprep.mubr.f32.mxu0 0.0
    %v899 = vand.u32 %v141, 4294901760
    %900 = vmatmul.mubr.f32.gmra.mxu0 %v899
    %v901 = vpop.f32.mrf.mxu0
    %v902 = vadd.f32 %v533, %v901
    %v903 = vpop.f32.mrf.mxu0
    %904 = vmatprep.mubr.f32.mxu0 0.0
    %v905 = vand.u32 %v144, 4294901760
    %906 = vmatmul.mubr.f32.gmra.mxu0 %v905
    %v907 = vpop.f32.mrf.mxu0
    %v908 = vadd.f32 %v543, %v907
    %v909 = vpop.f32.mrf.mxu0
    %910 = vmatprep.mubr.f32.mxu0 0.0
    %v911 = vand.u32 %v147, 4294901760
    %912 = vmatmul.mubr.f32.gmra.mxu0 %v911
    %v913 = vpop.f32.mrf.mxu0
    %v914 = vadd.f32 %v553, %v913
    %v915 = vpop.f32.mrf.mxu0
    %916 = vmatprep.mubr.f32.mxu0 0.0
    %v917 = vand.u32 %v150, 4294901760
    %918 = vmatmul.mubr.f32.gmra.mxu0 %v917
    %v919 = vpop.f32.mrf.mxu0
    %v920 = vadd.f32 %v563, %v919
    %v921 = vpop.f32.mrf.mxu0
    %922 = vmatprep.mubr.f32.mxu0 0.0
    %v923 = vand.u32 %v153, 4294901760
    %924 = vmatmul.mubr.f32.gmra.mxu0 %v923
    %v925 = vpop.f32.mrf.mxu0
    %v926 = vadd.f32 %v573, %v925
    %v927 = vpop.f32.mrf.mxu0
    %928 = vmatprep.mubr.f32.mxu0 0.0
    %v929 = vand.u32 %v156, 4294901760
    %930 = vmatmul.mubr.f32.gmra.mxu0 %v929
    %v931 = vpop.f32.mrf.mxu0
    %v932 = vadd.f32 %v583, %v931
    %v933 = vpop.f32.mrf.mxu0
    %934 = vmatprep.mubr.f32.mxu0 0.0
    %v935 = vand.u32 %v159, 4294901760
    %936 = vmatmul.mubr.f32.gmra.mxu0 %v935
    %v937 = vpop.f32.mrf.mxu0
    %v938 = vadd.f32 %v593, %v937
    %v939 = vpop.f32.mrf.mxu0
    %940 = vmatprep.mubr.f32.mxu0 0.0
    %v941 = vand.u32 %v162, 4294901760
    %942 = vmatmul.mubr.f32.gmra.mxu0 %v941
    %v943 = vpop.f32.mrf.mxu0
    %v944 = vadd.f32 %v603, %v943
    %v945 = vpop.f32.mrf.mxu0
    %946 = vmatprep.mubr.f32.mxu0 0.0
    %v947 = vand.u32 %v165, 4294901760
    %948 = vmatmul.mubr.f32.gmra.mxu0 %v947
    %v949 = vpop.f32.mrf.mxu0
    %v950 = vadd.f32 %v613, %v949
    %v951 = vpop.f32.mrf.mxu0
    %952 = vdwg.mxu0
    %953 = vmatprep.subr.mxu0 0.0
    %v954 = vand.u32 %v213, 4294901760
    %v955 = vsub.f32 %v213, %v954
    %956 = vmatpush1.xpose.msra.mxu0 %v955
    %957 = vmatprep.subr.mxu0 0.0
    %v958 = vand.u32 %v210, 4294901760
    %v959 = vsub.f32 %v210, %v958
    %960 = vmatpush1.xpose.msra.mxu0 %v959
    %961 = vmatprep.subr.mxu0 0.0
    %v962 = vand.u32 %v207, 4294901760
    %v963 = vsub.f32 %v207, %v962
    %964 = vmatpush1.xpose.msra.mxu0 %v963
    %965 = vmatprep.subr.mxu0 0.0
    %v966 = vand.u32 %v204, 4294901760
    %v967 = vsub.f32 %v204, %v966
    %968 = vmatpush1.xpose.msra.mxu0 %v967
    %969 = vmatprep.subr.mxu0 0.0
    %v970 = vand.u32 %v201, 4294901760
    %v971 = vsub.f32 %v201, %v970
    %972 = vmatpush1.xpose.msra.mxu0 %v971
    %973 = vmatprep.subr.mxu0 0.0
    %v974 = vand.u32 %v198, 4294901760
    %v975 = vsub.f32 %v198, %v974
    %976 = vmatpush1.xpose.msra.mxu0 %v975
    %977 = vmatprep.subr.mxu0 0.0
    %v978 = vand.u32 %v195, 4294901760
    %v979 = vsub.f32 %v195, %v978
    %980 = vmatpush1.xpose.msra.mxu0 %v979
    %981 = vmatprep.subr.mxu0 0.0
    %v982 = vand.u32 %v192, 4294901760
    %v983 = vsub.f32 %v192, %v982
    %984 = vmatpush1.xpose.msra.mxu0 %v983
    %985 = vmatprep.subr.mxu0 0.0
    %v986 = vand.u32 %v189, 4294901760
    %v987 = vsub.f32 %v189, %v986
    %988 = vmatpush1.xpose.msra.mxu0 %v987
    %989 = vmatprep.subr.mxu0 0.0
    %v990 = vand.u32 %v186, 4294901760
    %v991 = vsub.f32 %v186, %v990
    %992 = vmatpush1.xpose.msra.mxu0 %v991
    %993 = vmatprep.subr.mxu0 0.0
    %v994 = vand.u32 %v183, 4294901760
    %v995 = vsub.f32 %v183, %v994
    %996 = vmatpush1.xpose.msra.mxu0 %v995
    %997 = vmatprep.subr.mxu0 0.0
    %v998 = vand.u32 %v180, 4294901760
    %v999 = vsub.f32 %v180, %v998
    %1000 = vmatpush1.xpose.msra.mxu0 %v999
    %1001 = vmatprep.subr.mxu0 0.0
    %v1002 = vand.u32 %v177, 4294901760
    %v1003 = vsub.f32 %v177, %v1002
    %1004 = vmatpush1.xpose.msra.mxu0 %v1003
    %1005 = vmatprep.subr.mxu0 0.0
    %v1006 = vand.u32 %v174, 4294901760
    %v1007 = vsub.f32 %v174, %v1006
    %1008 = vmatpush1.xpose.msra.mxu0 %v1007
    %1009 = vmatprep.subr.mxu0 0.0
    %v1010 = vand.u32 %v171, 4294901760
    %v1011 = vsub.f32 %v171, %v1010
    %1012 = vmatpush1.xpose.msra.mxu0 %v1011
    %1013 = vmatprep.subr.mxu0 0.0
    %v1014 = vand.u32 %v168, 4294901760
    %v1015 = vsub.f32 %v168, %v1014
    %1016 = vmatpush1.xpose.msra.mxu0 %v1015
    %1017 = vmatprep.subr.mxu0 0.0
    %1018 = vmatpush2.xpose.msra.mxu0 0.0
    %1019 = vmatprep.subr.mxu0 0.0
    %1020 = vmatpush2.xpose.msra.mxu0 0.0
    %1021 = vmatprep.subr.mxu0 0.0
    %1022 = vmatpush2.xpose.msra.mxu0 0.0
    %1023 = vmatprep.subr.mxu0 0.0
    %1024 = vmatpush2.xpose.msra.mxu0 0.0
    %1025 = vmatprep.subr.mxu0 0.0
    %1026 = vmatpush2.xpose.msra.mxu0 0.0
    %1027 = vmatprep.subr.mxu0 0.0
    %1028 = vmatpush2.xpose.msra.mxu0 0.0
    %1029 = vmatprep.subr.mxu0 0.0
    %1030 = vmatpush2.xpose.msra.mxu0 0.0
    %1031 = vmatprep.subr.mxu0 0.0
    %1032 = vmatpush2.xpose.msra.mxu0 0.0
    %1033 = vmatprep.subr.mxu0 0.0
    %1034 = vmatpush2.xpose.msra.mxu0 0.0
    %1035 = vmatprep.subr.mxu0 0.0
    %1036 = vmatpush2.xpose.msra.mxu0 0.0
    %1037 = vmatprep.subr.mxu0 0.0
    %1038 = vmatpush2.xpose.msra.mxu0 0.0
    %1039 = vmatprep.subr.mxu0 0.0
    %1040 = vmatpush2.xpose.msra.mxu0 0.0
    %1041 = vmatprep.subr.mxu0 0.0
    %1042 = vmatpush2.xpose.msra.mxu0 0.0
    %1043 = vmatprep.subr.mxu0 0.0
    %1044 = vmatpush2.xpose.msra.mxu0 0.0
    %1045 = vmatprep.subr.mxu0 0.0
    %1046 = vmatpush2.xpose.msra.mxu0 0.0
    %1047 = vmatprep.subr.mxu0 0.0
    %1048 = vmatpush2.xpose.msra.mxu0 0.0
    %1049 = vmatprep.mubr.f32.mxu0 0.0
    %v1050 = vand.u32 %v72, 4294901760
    %v1051 = vsub.f32 %v72, %v1050
    %1052 = vmatmul.mubr.f32.gmra.mxu0 %v1051
    %v1053 = vpop.f32.mrf.mxu0
    %v1054 = vadd.f32 %v764, %v1053
    %v1055 = vpop.f32.mrf.mxu0
    %1056 = vmatprep.mubr.f32.mxu0 0.0
    %v1057 = vand.u32 %v75, 4294901760
    %v1058 = vsub.f32 %v75, %v1057
    %1059 = vmatmul.mubr.f32.gmra.mxu0 %v1058
    %v1060 = vpop.f32.mrf.mxu0
    %v1061 = vadd.f32 %v770, %v1060
    %v1062 = vpop.f32.mrf.mxu0
    %1063 = vmatprep.mubr.f32.mxu0 0.0
    %v1064 = vand.u32 %v78, 4294901760
    %v1065 = vsub.f32 %v78, %v1064
    %1066 = vmatmul.mubr.f32.gmra.mxu0 %v1065
    %v1067 = vpop.f32.mrf.mxu0
    %v1068 = vadd.f32 %v776, %v1067
    %v1069 = vpop.f32.mrf.mxu0
    %1070 = vmatprep.mubr.f32.mxu0 0.0
    %v1071 = vand.u32 %v81, 4294901760
    %v1072 = vsub.f32 %v81, %v1071
    %1073 = vmatmul.mubr.f32.gmra.mxu0 %v1072
    %v1074 = vpop.f32.mrf.mxu0
    %v1075 = vadd.f32 %v782, %v1074
    %v1076 = vpop.f32.mrf.mxu0
    %1077 = vmatprep.mubr.f32.mxu0 0.0
    %v1078 = vand.u32 %v84, 4294901760
    %v1079 = vsub.f32 %v84, %v1078
    %1080 = vmatmul.mubr.f32.gmra.mxu0 %v1079
    %v1081 = vpop.f32.mrf.mxu0
    %v1082 = vadd.f32 %v788, %v1081
    %v1083 = vpop.f32.mrf.mxu0
    %1084 = vmatprep.mubr.f32.mxu0 0.0
    %v1085 = vand.u32 %v87, 4294901760
    %v1086 = vsub.f32 %v87, %v1085
    %1087 = vmatmul.mubr.f32.gmra.mxu0 %v1086
    %v1088 = vpop.f32.mrf.mxu0
    %v1089 = vadd.f32 %v794, %v1088
    %v1090 = vpop.f32.mrf.mxu0
    %1091 = vmatprep.mubr.f32.mxu0 0.0
    %v1092 = vand.u32 %v90, 4294901760
    %v1093 = vsub.f32 %v90, %v1092
    %1094 = vmatmul.mubr.f32.gmra.mxu0 %v1093
    %v1095 = vpop.f32.mrf.mxu0
    %v1096 = vadd.f32 %v800, %v1095
    %v1097 = vpop.f32.mrf.mxu0
    %1098 = vmatprep.mubr.f32.mxu0 0.0
    %v1099 = vand.u32 %v93, 4294901760
    %v1100 = vsub.f32 %v93, %v1099
    %1101 = vmatmul.mubr.f32.gmra.mxu0 %v1100
    %v1102 = vpop.f32.mrf.mxu0
    %v1103 = vadd.f32 %v806, %v1102
    %v1104 = vpop.f32.mrf.mxu0
    %1105 = vmatprep.mubr.f32.mxu0 0.0
    %v1106 = vand.u32 %v96, 4294901760
    %v1107 = vsub.f32 %v96, %v1106
    %1108 = vmatmul.mubr.f32.gmra.mxu0 %v1107
    %v1109 = vpop.f32.mrf.mxu0
    %v1110 = vadd.f32 %v812, %v1109
    %v1111 = vpop.f32.mrf.mxu0
    %1112 = vmatprep.mubr.f32.mxu0 0.0
    %v1113 = vand.u32 %v99, 4294901760
    %v1114 = vsub.f32 %v99, %v1113
    %1115 = vmatmul.mubr.f32.gmra.mxu0 %v1114
    %v1116 = vpop.f32.mrf.mxu0
    %v1117 = vadd.f32 %v818, %v1116
    %v1118 = vpop.f32.mrf.mxu0
    %1119 = vmatprep.mubr.f32.mxu0 0.0
    %v1120 = vand.u32 %v102, 4294901760
    %v1121 = vsub.f32 %v102, %v1120
    %1122 = vmatmul.mubr.f32.gmra.mxu0 %v1121
    %v1123 = vpop.f32.mrf.mxu0
    %v1124 = vadd.f32 %v824, %v1123
    %v1125 = vpop.f32.mrf.mxu0
    %1126 = vmatprep.mubr.f32.mxu0 0.0
    %v1127 = vand.u32 %v105, 4294901760
    %v1128 = vsub.f32 %v105, %v1127
    %1129 = vmatmul.mubr.f32.gmra.mxu0 %v1128
    %v1130 = vpop.f32.mrf.mxu0
    %v1131 = vadd.f32 %v830, %v1130
    %v1132 = vpop.f32.mrf.mxu0
    %1133 = vmatprep.mubr.f32.mxu0 0.0
    %v1134 = vand.u32 %v108, 4294901760
    %v1135 = vsub.f32 %v108, %v1134
    %1136 = vmatmul.mubr.f32.gmra.mxu0 %v1135
    %v1137 = vpop.f32.mrf.mxu0
    %v1138 = vadd.f32 %v836, %v1137
    %v1139 = vpop.f32.mrf.mxu0
    %1140 = vmatprep.mubr.f32.mxu0 0.0
    %v1141 = vand.u32 %v111, 4294901760
    %v1142 = vsub.f32 %v111, %v1141
    %1143 = vmatmul.mubr.f32.gmra.mxu0 %v1142
    %v1144 = vpop.f32.mrf.mxu0
    %v1145 = vadd.f32 %v842, %v1144
    %v1146 = vpop.f32.mrf.mxu0
    %1147 = vmatprep.mubr.f32.mxu0 0.0
    %v1148 = vand.u32 %v114, 4294901760
    %v1149 = vsub.f32 %v114, %v1148
    %1150 = vmatmul.mubr.f32.gmra.mxu0 %v1149
    %v1151 = vpop.f32.mrf.mxu0
    %v1152 = vadd.f32 %v848, %v1151
    %v1153 = vpop.f32.mrf.mxu0
    %1154 = vmatprep.mubr.f32.mxu0 0.0
    %v1155 = vand.u32 %v117, 4294901760
    %v1156 = vsub.f32 %v117, %v1155
    %1157 = vmatmul.mubr.f32.gmra.mxu0 %v1156
    %v1158 = vpop.f32.mrf.mxu0
    %v1159 = vadd.f32 %v854, %v1158
    %v1160 = vpop.f32.mrf.mxu0
    %1161 = vmatprep.mubr.f32.mxu0 0.0
    %v1162 = vand.u32 %v120, 4294901760
    %v1163 = vsub.f32 %v120, %v1162
    %1164 = vmatmul.mubr.f32.gmra.mxu0 %v1163
    %v1165 = vpop.f32.mrf.mxu0
    %v1166 = vadd.f32 %v860, %v1165
    %v1167 = vpop.f32.mrf.mxu0
    %1168 = vmatprep.mubr.f32.mxu0 0.0
    %v1169 = vand.u32 %v123, 4294901760
    %v1170 = vsub.f32 %v123, %v1169
    %1171 = vmatmul.mubr.f32.gmra.mxu0 %v1170
    %v1172 = vpop.f32.mrf.mxu0
    %v1173 = vadd.f32 %v866, %v1172
    %v1174 = vpop.f32.mrf.mxu0
    %1175 = vmatprep.mubr.f32.mxu0 0.0
    %v1176 = vand.u32 %v126, 4294901760
    %v1177 = vsub.f32 %v126, %v1176
    %1178 = vmatmul.mubr.f32.gmra.mxu0 %v1177
    %v1179 = vpop.f32.mrf.mxu0
    %v1180 = vadd.f32 %v872, %v1179
    %v1181 = vpop.f32.mrf.mxu0
    %1182 = vmatprep.mubr.f32.mxu0 0.0
    %v1183 = vand.u32 %v129, 4294901760
    %v1184 = vsub.f32 %v129, %v1183
    %1185 = vmatmul.mubr.f32.gmra.mxu0 %v1184
    %v1186 = vpop.f32.mrf.mxu0
    %v1187 = vadd.f32 %v878, %v1186
    %v1188 = vpop.f32.mrf.mxu0
    %1189 = vmatprep.mubr.f32.mxu0 0.0
    %v1190 = vand.u32 %v132, 4294901760
    %v1191 = vsub.f32 %v132, %v1190
    %1192 = vmatmul.mubr.f32.gmra.mxu0 %v1191
    %v1193 = vpop.f32.mrf.mxu0
    %v1194 = vadd.f32 %v884, %v1193
    %v1195 = vpop.f32.mrf.mxu0
    %1196 = vmatprep.mubr.f32.mxu0 0.0
    %v1197 = vand.u32 %v135, 4294901760
    %v1198 = vsub.f32 %v135, %v1197
    %1199 = vmatmul.mubr.f32.gmra.mxu0 %v1198
    %v1200 = vpop.f32.mrf.mxu0
    %v1201 = vadd.f32 %v890, %v1200
    %v1202 = vpop.f32.mrf.mxu0
    %1203 = vmatprep.mubr.f32.mxu0 0.0
    %v1204 = vand.u32 %v138, 4294901760
    %v1205 = vsub.f32 %v138, %v1204
    %1206 = vmatmul.mubr.f32.gmra.mxu0 %v1205
    %v1207 = vpop.f32.mrf.mxu0
    %v1208 = vadd.f32 %v896, %v1207
    %v1209 = vpop.f32.mrf.mxu0
    %1210 = vmatprep.mubr.f32.mxu0 0.0
    %v1211 = vand.u32 %v141, 4294901760
    %v1212 = vsub.f32 %v141, %v1211
    %1213 = vmatmul.mubr.f32.gmra.mxu0 %v1212
    %v1214 = vpop.f32.mrf.mxu0
    %v1215 = vadd.f32 %v902, %v1214
    %v1216 = vpop.f32.mrf.mxu0
    %1217 = vmatprep.mubr.f32.mxu0 0.0
    %v1218 = vand.u32 %v144, 4294901760
    %v1219 = vsub.f32 %v144, %v1218
    %1220 = vmatmul.mubr.f32.gmra.mxu0 %v1219
    %v1221 = vpop.f32.mrf.mxu0
    %v1222 = vadd.f32 %v908, %v1221
    %v1223 = vpop.f32.mrf.mxu0
    %1224 = vmatprep.mubr.f32.mxu0 0.0
    %v1225 = vand.u32 %v147, 4294901760
    %v1226 = vsub.f32 %v147, %v1225
    %1227 = vmatmul.mubr.f32.gmra.mxu0 %v1226
    %v1228 = vpop.f32.mrf.mxu0
    %v1229 = vadd.f32 %v914, %v1228
    %v1230 = vpop.f32.mrf.mxu0
    %1231 = vmatprep.mubr.f32.mxu0 0.0
    %v1232 = vand.u32 %v150, 4294901760
    %v1233 = vsub.f32 %v150, %v1232
    %1234 = vmatmul.mubr.f32.gmra.mxu0 %v1233
    %v1235 = vpop.f32.mrf.mxu0
    %v1236 = vadd.f32 %v920, %v1235
    %v1237 = vpop.f32.mrf.mxu0
    %1238 = vmatprep.mubr.f32.mxu0 0.0
    %v1239 = vand.u32 %v153, 4294901760
    %v1240 = vsub.f32 %v153, %v1239
    %1241 = vmatmul.mubr.f32.gmra.mxu0 %v1240
    %v1242 = vpop.f32.mrf.mxu0
    %v1243 = vadd.f32 %v926, %v1242
    %v1244 = vpop.f32.mrf.mxu0
    %1245 = vmatprep.mubr.f32.mxu0 0.0
    %v1246 = vand.u32 %v156, 4294901760
    %v1247 = vsub.f32 %v156, %v1246
    %1248 = vmatmul.mubr.f32.gmra.mxu0 %v1247
    %v1249 = vpop.f32.mrf.mxu0
    %v1250 = vadd.f32 %v932, %v1249
    %v1251 = vpop.f32.mrf.mxu0
    %1252 = vmatprep.mubr.f32.mxu0 0.0
    %v1253 = vand.u32 %v159, 4294901760
    %v1254 = vsub.f32 %v159, %v1253
    %1255 = vmatmul.mubr.f32.gmra.mxu0 %v1254
    %v1256 = vpop.f32.mrf.mxu0
    %v1257 = vadd.f32 %v938, %v1256
    %v1258 = vpop.f32.mrf.mxu0
    %1259 = vmatprep.mubr.f32.mxu0 0.0
    %v1260 = vand.u32 %v162, 4294901760
    %v1261 = vsub.f32 %v162, %v1260
    %1262 = vmatmul.mubr.f32.gmra.mxu0 %v1261
    %v1263 = vpop.f32.mrf.mxu0
    %v1264 = vadd.f32 %v944, %v1263
    %v1265 = vpop.f32.mrf.mxu0
    %1266 = vmatprep.mubr.f32.mxu0 0.0
    %v1267 = vand.u32 %v165, 4294901760
    %v1268 = vsub.f32 %v165, %v1267
    %1269 = vmatmul.mubr.f32.gmra.mxu0 %v1268
    %v1270 = vpop.f32.mrf.mxu0
    %v1271 = vadd.f32 %v950, %v1270
    %v1272 = vpop.f32.mrf.mxu0
    %1273 = vdwg.mxu0
    %1274 = vmatprep.subr.mxu0 0.0
    %v1275 = vand.u32 %v213, 4294901760
    %1276 = vmatpush1.xpose.msra.mxu0 %v1275
    %1277 = vmatprep.subr.mxu0 0.0
    %v1278 = vand.u32 %v210, 4294901760
    %1279 = vmatpush1.xpose.msra.mxu0 %v1278
    %1280 = vmatprep.subr.mxu0 0.0
    %v1281 = vand.u32 %v207, 4294901760
    %1282 = vmatpush1.xpose.msra.mxu0 %v1281
    %1283 = vmatprep.subr.mxu0 0.0
    %v1284 = vand.u32 %v204, 4294901760
    %1285 = vmatpush1.xpose.msra.mxu0 %v1284
    %1286 = vmatprep.subr.mxu0 0.0
    %v1287 = vand.u32 %v201, 4294901760
    %1288 = vmatpush1.xpose.msra.mxu0 %v1287
    %1289 = vmatprep.subr.mxu0 0.0
    %v1290 = vand.u32 %v198, 4294901760
    %1291 = vmatpush1.xpose.msra.mxu0 %v1290
    %1292 = vmatprep.subr.mxu0 0.0
    %v1293 = vand.u32 %v195, 4294901760
    %1294 = vmatpush1.xpose.msra.mxu0 %v1293
    %1295 = vmatprep.subr.mxu0 0.0
    %v1296 = vand.u32 %v192, 4294901760
    %1297 = vmatpush1.xpose.msra.mxu0 %v1296
    %1298 = vmatprep.subr.mxu0 0.0
    %v1299 = vand.u32 %v189, 4294901760
    %1300 = vmatpush1.xpose.msra.mxu0 %v1299
    %1301 = vmatprep.subr.mxu0 0.0
    %v1302 = vand.u32 %v186, 4294901760
    %1303 = vmatpush1.xpose.msra.mxu0 %v1302
    %1304 = vmatprep.subr.mxu0 0.0
    %v1305 = vand.u32 %v183, 4294901760
    %1306 = vmatpush1.xpose.msra.mxu0 %v1305
    %1307 = vmatprep.subr.mxu0 0.0
    %v1308 = vand.u32 %v180, 4294901760
    %1309 = vmatpush1.xpose.msra.mxu0 %v1308
    %1310 = vmatprep.subr.mxu0 0.0
    %v1311 = vand.u32 %v177, 4294901760
    %1312 = vmatpush1.xpose.msra.mxu0 %v1311
    %1313 = vmatprep.subr.mxu0 0.0
    %v1314 = vand.u32 %v174, 4294901760
    %1315 = vmatpush1.xpose.msra.mxu0 %v1314
    %1316 = vmatprep.subr.mxu0 0.0
    %v1317 = vand.u32 %v171, 4294901760
    %1318 = vmatpush1.xpose.msra.mxu0 %v1317
    %1319 = vmatprep.subr.mxu0 0.0
    %v1320 = vand.u32 %v168, 4294901760
    %1321 = vmatpush1.xpose.msra.mxu0 %v1320
    %1322 = vmatprep.subr.mxu0 0.0
    %1323 = vmatpush2.xpose.msra.mxu0 0.0
    %1324 = vmatprep.subr.mxu0 0.0
    %1325 = vmatpush2.xpose.msra.mxu0 0.0
    %1326 = vmatprep.subr.mxu0 0.0
    %1327 = vmatpush2.xpose.msra.mxu0 0.0
    %1328 = vmatprep.subr.mxu0 0.0
    %1329 = vmatpush2.xpose.msra.mxu0 0.0
    %1330 = vmatprep.subr.mxu0 0.0
    %1331 = vmatpush2.xpose.msra.mxu0 0.0
    %1332 = vmatprep.subr.mxu0 0.0
    %1333 = vmatpush2.xpose.msra.mxu0 0.0
    %1334 = vmatprep.subr.mxu0 0.0
    %1335 = vmatpush2.xpose.msra.mxu0 0.0
    %1336 = vmatprep.subr.mxu0 0.0
    %1337 = vmatpush2.xpose.msra.mxu0 0.0
    %1338 = vmatprep.subr.mxu0 0.0
    %1339 = vmatpush2.xpose.msra.mxu0 0.0
    %1340 = vmatprep.subr.mxu0 0.0
    %1341 = vmatpush2.xpose.msra.mxu0 0.0
    %1342 = vmatprep.subr.mxu0 0.0
    %1343 = vmatpush2.xpose.msra.mxu0 0.0
    %1344 = vmatprep.subr.mxu0 0.0
    %1345 = vmatpush2.xpose.msra.mxu0 0.0
    %1346 = vmatprep.subr.mxu0 0.0
    %1347 = vmatpush2.xpose.msra.mxu0 0.0
    %1348 = vmatprep.subr.mxu0 0.0
    %1349 = vmatpush2.xpose.msra.mxu0 0.0
    %1350 = vmatprep.subr.mxu0 0.0
    %1351 = vmatpush2.xpose.msra.mxu0 0.0
    %1352 = vmatprep.subr.mxu0 0.0
    %1353 = vmatpush2.xpose.msra.mxu0 0.0
    %1354 = vmatprep.mubr.f32.mxu0 0.0
    %v1355 = vand.u32 %v72, 4294901760
    %v1356 = vsub.f32 %v72, %v1355
    %v1357 = vand.u32 %v1356, 4294901760
    %1358 = vmatmul.mubr.f32.gmra.mxu0 %v1357
    %v1359 = vpop.f32.mrf.mxu0
    %v1360 = vadd.f32 %v1054, %v1359
    %v1361 = vpop.f32.mrf.mxu0
    %1362 = vmatprep.mubr.f32.mxu0 0.0
    %v1363 = vand.u32 %v75, 4294901760
    %v1364 = vsub.f32 %v75, %v1363
    %v1365 = vand.u32 %v1364, 4294901760
    %1366 = vmatmul.mubr.f32.gmra.mxu0 %v1365
    %v1367 = vpop.f32.mrf.mxu0
    %v1368 = vadd.f32 %v1061, %v1367
    %v1369 = vpop.f32.mrf.mxu0
    %1370 = vmatprep.mubr.f32.mxu0 0.0
    %v1371 = vand.u32 %v78, 4294901760
    %v1372 = vsub.f32 %v78, %v1371
    %v1373 = vand.u32 %v1372, 4294901760
    %1374 = vmatmul.mubr.f32.gmra.mxu0 %v1373
    %v1375 = vpop.f32.mrf.mxu0
    %v1376 = vadd.f32 %v1068, %v1375
    %v1377 = vpop.f32.mrf.mxu0
    %1378 = vmatprep.mubr.f32.mxu0 0.0
    %v1379 = vand.u32 %v81, 4294901760
    %v1380 = vsub.f32 %v81, %v1379
    %v1381 = vand.u32 %v1380, 4294901760
    %1382 = vmatmul.mubr.f32.gmra.mxu0 %v1381
    %v1383 = vpop.f32.mrf.mxu0
    %v1384 = vadd.f32 %v1075, %v1383
    %v1385 = vpop.f32.mrf.mxu0
    %1386 = vmatprep.mubr.f32.mxu0 0.0
    %v1387 = vand.u32 %v84, 4294901760
    %v1388 = vsub.f32 %v84, %v1387
    %v1389 = vand.u32 %v1388, 4294901760
    %1390 = vmatmul.mubr.f32.gmra.mxu0 %v1389
    %v1391 = vpop.f32.mrf.mxu0
    %v1392 = vadd.f32 %v1082, %v1391
    %v1393 = vpop.f32.mrf.mxu0
    %1394 = vmatprep.mubr.f32.mxu0 0.0
    %v1395 = vand.u32 %v87, 4294901760
    %v1396 = vsub.f32 %v87, %v1395
    %v1397 = vand.u32 %v1396, 4294901760
    %1398 = vmatmul.mubr.f32.gmra.mxu0 %v1397
    %v1399 = vpop.f32.mrf.mxu0
    %v1400 = vadd.f32 %v1089, %v1399
    %v1401 = vpop.f32.mrf.mxu0
    %1402 = vmatprep.mubr.f32.mxu0 0.0
    %v1403 = vand.u32 %v90, 4294901760
    %v1404 = vsub.f32 %v90, %v1403
    %v1405 = vand.u32 %v1404, 4294901760
    %1406 = vmatmul.mubr.f32.gmra.mxu0 %v1405
    %v1407 = vpop.f32.mrf.mxu0
    %v1408 = vadd.f32 %v1096, %v1407
    %v1409 = vpop.f32.mrf.mxu0
    %1410 = vmatprep.mubr.f32.mxu0 0.0
    %v1411 = vand.u32 %v93, 4294901760
    %v1412 = vsub.f32 %v93, %v1411
    %v1413 = vand.u32 %v1412, 4294901760
    %1414 = vmatmul.mubr.f32.gmra.mxu0 %v1413
    %v1415 = vpop.f32.mrf.mxu0
    %v1416 = vadd.f32 %v1103, %v1415
    %v1417 = vpop.f32.mrf.mxu0
    %1418 = vmatprep.mubr.f32.mxu0 0.0
    %v1419 = vand.u32 %v96, 4294901760
    %v1420 = vsub.f32 %v96, %v1419
    %v1421 = vand.u32 %v1420, 4294901760
    %1422 = vmatmul.mubr.f32.gmra.mxu0 %v1421
    %v1423 = vpop.f32.mrf.mxu0
    %v1424 = vadd.f32 %v1110, %v1423
    %v1425 = vpop.f32.mrf.mxu0
    %1426 = vmatprep.mubr.f32.mxu0 0.0
    %v1427 = vand.u32 %v99, 4294901760
    %v1428 = vsub.f32 %v99, %v1427
    %v1429 = vand.u32 %v1428, 4294901760
    %1430 = vmatmul.mubr.f32.gmra.mxu0 %v1429
    %v1431 = vpop.f32.mrf.mxu0
    %v1432 = vadd.f32 %v1117, %v1431
    %v1433 = vpop.f32.mrf.mxu0
    %1434 = vmatprep.mubr.f32.mxu0 0.0
    %v1435 = vand.u32 %v102, 4294901760
    %v1436 = vsub.f32 %v102, %v1435
    %v1437 = vand.u32 %v1436, 4294901760
    %1438 = vmatmul.mubr.f32.gmra.mxu0 %v1437
    %v1439 = vpop.f32.mrf.mxu0
    %v1440 = vadd.f32 %v1124, %v1439
    %v1441 = vpop.f32.mrf.mxu0
    %1442 = vmatprep.mubr.f32.mxu0 0.0
    %v1443 = vand.u32 %v105, 4294901760
    %v1444 = vsub.f32 %v105, %v1443
    %v1445 = vand.u32 %v1444, 4294901760
    %1446 = vmatmul.mubr.f32.gmra.mxu0 %v1445
    %v1447 = vpop.f32.mrf.mxu0
    %v1448 = vadd.f32 %v1131, %v1447
    %v1449 = vpop.f32.mrf.mxu0
    %1450 = vmatprep.mubr.f32.mxu0 0.0
    %v1451 = vand.u32 %v108, 4294901760
    %v1452 = vsub.f32 %v108, %v1451
    %v1453 = vand.u32 %v1452, 4294901760
    %1454 = vmatmul.mubr.f32.gmra.mxu0 %v1453
    %v1455 = vpop.f32.mrf.mxu0
    %v1456 = vadd.f32 %v1138, %v1455
    %v1457 = vpop.f32.mrf.mxu0
    %1458 = vmatprep.mubr.f32.mxu0 0.0
    %v1459 = vand.u32 %v111, 4294901760
    %v1460 = vsub.f32 %v111, %v1459
    %v1461 = vand.u32 %v1460, 4294901760
    %1462 = vmatmul.mubr.f32.gmra.mxu0 %v1461
    %v1463 = vpop.f32.mrf.mxu0
    %v1464 = vadd.f32 %v1145, %v1463
    %v1465 = vpop.f32.mrf.mxu0
    %1466 = vmatprep.mubr.f32.mxu0 0.0
    %v1467 = vand.u32 %v114, 4294901760
    %v1468 = vsub.f32 %v114, %v1467
    %v1469 = vand.u32 %v1468, 4294901760
    %1470 = vmatmul.mubr.f32.gmra.mxu0 %v1469
    %v1471 = vpop.f32.mrf.mxu0
    %v1472 = vadd.f32 %v1152, %v1471
    %v1473 = vpop.f32.mrf.mxu0
    %1474 = vmatprep.mubr.f32.mxu0 0.0
    %v1475 = vand.u32 %v117, 4294901760
    %v1476 = vsub.f32 %v117, %v1475
    %v1477 = vand.u32 %v1476, 4294901760
    %1478 = vmatmul.mubr.f32.gmra.mxu0 %v1477
    %v1479 = vpop.f32.mrf.mxu0
    %v1480 = vadd.f32 %v1159, %v1479
    %v1481 = vpop.f32.mrf.mxu0
    %1482 = vmatprep.mubr.f32.mxu0 0.0
    %v1483 = vand.u32 %v120, 4294901760
    %v1484 = vsub.f32 %v120, %v1483
    %v1485 = vand.u32 %v1484, 4294901760
    %1486 = vmatmul.mubr.f32.gmra.mxu0 %v1485
    %v1487 = vpop.f32.mrf.mxu0
    %v1488 = vadd.f32 %v1166, %v1487
    %v1489 = vpop.f32.mrf.mxu0
    %1490 = vmatprep.mubr.f32.mxu0 0.0
    %v1491 = vand.u32 %v123, 4294901760
    %v1492 = vsub.f32 %v123, %v1491
    %v1493 = vand.u32 %v1492, 4294901760
    %1494 = vmatmul.mubr.f32.gmra.mxu0 %v1493
    %v1495 = vpop.f32.mrf.mxu0
    %v1496 = vadd.f32 %v1173, %v1495
    %v1497 = vpop.f32.mrf.mxu0
    %1498 = vmatprep.mubr.f32.mxu0 0.0
    %v1499 = vand.u32 %v126, 4294901760
    %v1500 = vsub.f32 %v126, %v1499
    %v1501 = vand.u32 %v1500, 4294901760
    %1502 = vmatmul.mubr.f32.gmra.mxu0 %v1501
    %v1503 = vpop.f32.mrf.mxu0
    %v1504 = vadd.f32 %v1180, %v1503
    %v1505 = vpop.f32.mrf.mxu0
    %1506 = vmatprep.mubr.f32.mxu0 0.0
    %v1507 = vand.u32 %v129, 4294901760
    %v1508 = vsub.f32 %v129, %v1507
    %v1509 = vand.u32 %v1508, 4294901760
    %1510 = vmatmul.mubr.f32.gmra.mxu0 %v1509
    %v1511 = vpop.f32.mrf.mxu0
    %v1512 = vadd.f32 %v1187, %v1511
    %v1513 = vpop.f32.mrf.mxu0
    %1514 = vmatprep.mubr.f32.mxu0 0.0
    %v1515 = vand.u32 %v132, 4294901760
    %v1516 = vsub.f32 %v132, %v1515
    %v1517 = vand.u32 %v1516, 4294901760
    %1518 = vmatmul.mubr.f32.gmra.mxu0 %v1517
    %v1519 = vpop.f32.mrf.mxu0
    %v1520 = vadd.f32 %v1194, %v1519
    %v1521 = vpop.f32.mrf.mxu0
    %1522 = vmatprep.mubr.f32.mxu0 0.0
    %v1523 = vand.u32 %v135, 4294901760
    %v1524 = vsub.f32 %v135, %v1523
    %v1525 = vand.u32 %v1524, 4294901760
    %1526 = vmatmul.mubr.f32.gmra.mxu0 %v1525
    %v1527 = vpop.f32.mrf.mxu0
    %v1528 = vadd.f32 %v1201, %v1527
    %v1529 = vpop.f32.mrf.mxu0
    %1530 = vmatprep.mubr.f32.mxu0 0.0
    %v1531 = vand.u32 %v138, 4294901760
    %v1532 = vsub.f32 %v138, %v1531
    %v1533 = vand.u32 %v1532, 4294901760
    %1534 = vmatmul.mubr.f32.gmra.mxu0 %v1533
    %v1535 = vpop.f32.mrf.mxu0
    %v1536 = vadd.f32 %v1208, %v1535
    %v1537 = vpop.f32.mrf.mxu0
    %1538 = vmatprep.mubr.f32.mxu0 0.0
    %v1539 = vand.u32 %v141, 4294901760
    %v1540 = vsub.f32 %v141, %v1539
    %v1541 = vand.u32 %v1540, 4294901760
    %1542 = vmatmul.mubr.f32.gmra.mxu0 %v1541
    %v1543 = vpop.f32.mrf.mxu0
    %v1544 = vadd.f32 %v1215, %v1543
    %v1545 = vpop.f32.mrf.mxu0
    %1546 = vmatprep.mubr.f32.mxu0 0.0
    %v1547 = vand.u32 %v144, 4294901760
    %v1548 = vsub.f32 %v144, %v1547
    %v1549 = vand.u32 %v1548, 4294901760
    %1550 = vmatmul.mubr.f32.gmra.mxu0 %v1549
    %v1551 = vpop.f32.mrf.mxu0
    %v1552 = vadd.f32 %v1222, %v1551
    %v1553 = vpop.f32.mrf.mxu0
    %1554 = vmatprep.mubr.f32.mxu0 0.0
    %v1555 = vand.u32 %v147, 4294901760
    %v1556 = vsub.f32 %v147, %v1555
    %v1557 = vand.u32 %v1556, 4294901760
    %1558 = vmatmul.mubr.f32.gmra.mxu0 %v1557
    %v1559 = vpop.f32.mrf.mxu0
    %v1560 = vadd.f32 %v1229, %v1559
    %v1561 = vpop.f32.mrf.mxu0
    %1562 = vmatprep.mubr.f32.mxu0 0.0
    %v1563 = vand.u32 %v150, 4294901760
    %v1564 = vsub.f32 %v150, %v1563
    %v1565 = vand.u32 %v1564, 4294901760
    %1566 = vmatmul.mubr.f32.gmra.mxu0 %v1565
    %v1567 = vpop.f32.mrf.mxu0
    %v1568 = vadd.f32 %v1236, %v1567
    %v1569 = vpop.f32.mrf.mxu0
    %1570 = vmatprep.mubr.f32.mxu0 0.0
    %v1571 = vand.u32 %v153, 4294901760
    %v1572 = vsub.f32 %v153, %v1571
    %v1573 = vand.u32 %v1572, 4294901760
    %1574 = vmatmul.mubr.f32.gmra.mxu0 %v1573
    %v1575 = vpop.f32.mrf.mxu0
    %v1576 = vadd.f32 %v1243, %v1575
    %v1577 = vpop.f32.mrf.mxu0
    %1578 = vmatprep.mubr.f32.mxu0 0.0
    %v1579 = vand.u32 %v156, 4294901760
    %v1580 = vsub.f32 %v156, %v1579
    %v1581 = vand.u32 %v1580, 4294901760
    %1582 = vmatmul.mubr.f32.gmra.mxu0 %v1581
    %v1583 = vpop.f32.mrf.mxu0
    %v1584 = vadd.f32 %v1250, %v1583
    %v1585 = vpop.f32.mrf.mxu0
    %1586 = vmatprep.mubr.f32.mxu0 0.0
    %v1587 = vand.u32 %v159, 4294901760
    %v1588 = vsub.f32 %v159, %v1587
    %v1589 = vand.u32 %v1588, 4294901760
    %1590 = vmatmul.mubr.f32.gmra.mxu0 %v1589
    %v1591 = vpop.f32.mrf.mxu0
    %v1592 = vadd.f32 %v1257, %v1591
    %v1593 = vpop.f32.mrf.mxu0
    %1594 = vmatprep.mubr.f32.mxu0 0.0
    %v1595 = vand.u32 %v162, 4294901760
    %v1596 = vsub.f32 %v162, %v1595
    %v1597 = vand.u32 %v1596, 4294901760
    %1598 = vmatmul.mubr.f32.gmra.mxu0 %v1597
    %v1599 = vpop.f32.mrf.mxu0
    %v1600 = vadd.f32 %v1264, %v1599
    %v1601 = vpop.f32.mrf.mxu0
    %1602 = vmatprep.mubr.f32.mxu0 0.0
    %v1603 = vand.u32 %v165, 4294901760
    %v1604 = vsub.f32 %v165, %v1603
    %v1605 = vand.u32 %v1604, 4294901760
    %1606 = vmatmul.mubr.f32.gmra.mxu0 %v1605
    %v1607 = vpop.f32.mrf.mxu0
    %v1608 = vadd.f32 %v1271, %v1607
    %v1609 = vpop.f32.mrf.mxu0
    %1610 = vdwg.mxu0
    %1611 = vmatprep.subr.mxu0 0.0
    %v1612 = vand.u32 %v213, 4294901760
    %v1613 = vsub.f32 %v213, %v1612
    %v1614 = vand.u32 %v1613, 4294901760
    %1615 = vmatpush1.xpose.msra.mxu0 %v1614
    %1616 = vmatprep.subr.mxu0 0.0
    %v1617 = vand.u32 %v210, 4294901760
    %v1618 = vsub.f32 %v210, %v1617
    %v1619 = vand.u32 %v1618, 4294901760
    %1620 = vmatpush1.xpose.msra.mxu0 %v1619
    %1621 = vmatprep.subr.mxu0 0.0
    %v1622 = vand.u32 %v207, 4294901760
    %v1623 = vsub.f32 %v207, %v1622
    %v1624 = vand.u32 %v1623, 4294901760
    %1625 = vmatpush1.xpose.msra.mxu0 %v1624
    %1626 = vmatprep.subr.mxu0 0.0
    %v1627 = vand.u32 %v204, 4294901760
    %v1628 = vsub.f32 %v204, %v1627
    %v1629 = vand.u32 %v1628, 4294901760
    %1630 = vmatpush1.xpose.msra.mxu0 %v1629
    %1631 = vmatprep.subr.mxu0 0.0
    %v1632 = vand.u32 %v201, 4294901760
    %v1633 = vsub.f32 %v201, %v1632
    %v1634 = vand.u32 %v1633, 4294901760
    %1635 = vmatpush1.xpose.msra.mxu0 %v1634
    %1636 = vmatprep.subr.mxu0 0.0
    %v1637 = vand.u32 %v198, 4294901760
    %v1638 = vsub.f32 %v198, %v1637
    %v1639 = vand.u32 %v1638, 4294901760
    %1640 = vmatpush1.xpose.msra.mxu0 %v1639
    %1641 = vmatprep.subr.mxu0 0.0
    %v1642 = vand.u32 %v195, 4294901760
    %v1643 = vsub.f32 %v195, %v1642
    %v1644 = vand.u32 %v1643, 4294901760
    %1645 = vmatpush1.xpose.msra.mxu0 %v1644
    %1646 = vmatprep.subr.mxu0 0.0
    %v1647 = vand.u32 %v192, 4294901760
    %v1648 = vsub.f32 %v192, %v1647
    %v1649 = vand.u32 %v1648, 4294901760
    %1650 = vmatpush1.xpose.msra.mxu0 %v1649
    %1651 = vmatprep.subr.mxu0 0.0
    %v1652 = vand.u32 %v189, 4294901760
    %v1653 = vsub.f32 %v189, %v1652
    %v1654 = vand.u32 %v1653, 4294901760
    %1655 = vmatpush1.xpose.msra.mxu0 %v1654
    %1656 = vmatprep.subr.mxu0 0.0
    %v1657 = vand.u32 %v186, 4294901760
    %v1658 = vsub.f32 %v186, %v1657
    %v1659 = vand.u32 %v1658, 4294901760
    %1660 = vmatpush1.xpose.msra.mxu0 %v1659
    %1661 = vmatprep.subr.mxu0 0.0
    %v1662 = vand.u32 %v183, 4294901760
    %v1663 = vsub.f32 %v183, %v1662
    %v1664 = vand.u32 %v1663, 4294901760
    %1665 = vmatpush1.xpose.msra.mxu0 %v1664
    %1666 = vmatprep.subr.mxu0 0.0
    %v1667 = vand.u32 %v180, 4294901760
    %v1668 = vsub.f32 %v180, %v1667
    %v1669 = vand.u32 %v1668, 4294901760
    %1670 = vmatpush1.xpose.msra.mxu0 %v1669
    %1671 = vmatprep.subr.mxu0 0.0
    %v1672 = vand.u32 %v177, 4294901760
    %v1673 = vsub.f32 %v177, %v1672
    %v1674 = vand.u32 %v1673, 4294901760
    %1675 = vmatpush1.xpose.msra.mxu0 %v1674
    %1676 = vmatprep.subr.mxu0 0.0
    %v1677 = vand.u32 %v174, 4294901760
    %v1678 = vsub.f32 %v174, %v1677
    %v1679 = vand.u32 %v1678, 4294901760
    %1680 = vmatpush1.xpose.msra.mxu0 %v1679
    %1681 = vmatprep.subr.mxu0 0.0
    %v1682 = vand.u32 %v171, 4294901760
    %v1683 = vsub.f32 %v171, %v1682
    %v1684 = vand.u32 %v1683, 4294901760
    %1685 = vmatpush1.xpose.msra.mxu0 %v1684
    %1686 = vmatprep.subr.mxu0 0.0
    %v1687 = vand.u32 %v168, 4294901760
    %v1688 = vsub.f32 %v168, %v1687
    %v1689 = vand.u32 %v1688, 4294901760
    %1690 = vmatpush1.xpose.msra.mxu0 %v1689
    %1691 = vmatprep.subr.mxu0 0.0
    %1692 = vmatpush2.xpose.msra.mxu0 0.0
    %1693 = vmatprep.subr.mxu0 0.0
    %1694 = vmatpush2.xpose.msra.mxu0 0.0
    %1695 = vmatprep.subr.mxu0 0.0
    %1696 = vmatpush2.xpose.msra.mxu0 0.0
    %1697 = vmatprep.subr.mxu0 0.0
    %1698 = vmatpush2.xpose.msra.mxu0 0.0
    %1699 = vmatprep.subr.mxu0 0.0
    %1700 = vmatpush2.xpose.msra.mxu0 0.0
    %1701 = vmatprep.subr.mxu0 0.0
    %1702 = vmatpush2.xpose.msra.mxu0 0.0
    %1703 = vmatprep.subr.mxu0 0.0
    %1704 = vmatpush2.xpose.msra.mxu0 0.0
    %1705 = vmatprep.subr.mxu0 0.0
    %1706 = vmatpush2.xpose.msra.mxu0 0.0
    %1707 = vmatprep.subr.mxu0 0.0
    %1708 = vmatpush2.xpose.msra.mxu0 0.0
    %1709 = vmatprep.subr.mxu0 0.0
    %1710 = vmatpush2.xpose.msra.mxu0 0.0
    %1711 = vmatprep.subr.mxu0 0.0
    %1712 = vmatpush2.xpose.msra.mxu0 0.0
    %1713 = vmatprep.subr.mxu0 0.0
    %1714 = vmatpush2.xpose.msra.mxu0 0.0
    %1715 = vmatprep.subr.mxu0 0.0
    %1716 = vmatpush2.xpose.msra.mxu0 0.0
    %1717 = vmatprep.subr.mxu0 0.0
    %1718 = vmatpush2.xpose.msra.mxu0 0.0
    %1719 = vmatprep.subr.mxu0 0.0
    %1720 = vmatpush2.xpose.msra.mxu0 0.0
    %1721 = vmatprep.subr.mxu0 0.0
    %1722 = vmatpush2.xpose.msra.mxu0 0.0
    %1723 = vmatprep.mubr.f32.mxu0 0.0
    %v1724 = vand.u32 %v72, 4294901760
    %1725 = vmatmul.mubr.f32.gmra.mxu0 %v1724
    %v1726 = vpop.f32.mrf.mxu0
    %v1727 = vadd.f32 %v1360, %v1726
    %v1728 = vpop.f32.mrf.mxu0
    %1729 = vmatprep.mubr.f32.mxu0 0.0
    %v1730 = vand.u32 %v75, 4294901760
    %1731 = vmatmul.mubr.f32.gmra.mxu0 %v1730
    %v1732 = vpop.f32.mrf.mxu0
    %v1733 = vadd.f32 %v1368, %v1732
    %v1734 = vpop.f32.mrf.mxu0
    %1735 = vmatprep.mubr.f32.mxu0 0.0
    %v1736 = vand.u32 %v78, 4294901760
    %1737 = vmatmul.mubr.f32.gmra.mxu0 %v1736
    %v1738 = vpop.f32.mrf.mxu0
    %v1739 = vadd.f32 %v1376, %v1738
    %v1740 = vpop.f32.mrf.mxu0
    %1741 = vmatprep.mubr.f32.mxu0 0.0
    %v1742 = vand.u32 %v81, 4294901760
    %1743 = vmatmul.mubr.f32.gmra.mxu0 %v1742
    %v1744 = vpop.f32.mrf.mxu0
    %v1745 = vadd.f32 %v1384, %v1744
    %v1746 = vpop.f32.mrf.mxu0
    %1747 = vmatprep.mubr.f32.mxu0 0.0
    %v1748 = vand.u32 %v84, 4294901760
    %1749 = vmatmul.mubr.f32.gmra.mxu0 %v1748
    %v1750 = vpop.f32.mrf.mxu0
    %v1751 = vadd.f32 %v1392, %v1750
    %v1752 = vpop.f32.mrf.mxu0
    %1753 = vmatprep.mubr.f32.mxu0 0.0
    %v1754 = vand.u32 %v87, 4294901760
    %1755 = vmatmul.mubr.f32.gmra.mxu0 %v1754
    %v1756 = vpop.f32.mrf.mxu0
    %v1757 = vadd.f32 %v1400, %v1756
    %v1758 = vpop.f32.mrf.mxu0
    %1759 = vmatprep.mubr.f32.mxu0 0.0
    %v1760 = vand.u32 %v90, 4294901760
    %1761 = vmatmul.mubr.f32.gmra.mxu0 %v1760
    %v1762 = vpop.f32.mrf.mxu0
    %v1763 = vadd.f32 %v1408, %v1762
    %v1764 = vpop.f32.mrf.mxu0
    %1765 = vmatprep.mubr.f32.mxu0 0.0
    %v1766 = vand.u32 %v93, 4294901760
    %1767 = vmatmul.mubr.f32.gmra.mxu0 %v1766
    %v1768 = vpop.f32.mrf.mxu0
    %v1769 = vadd.f32 %v1416, %v1768
    %v1770 = vpop.f32.mrf.mxu0
    %1771 = vmatprep.mubr.f32.mxu0 0.0
    %v1772 = vand.u32 %v96, 4294901760
    %1773 = vmatmul.mubr.f32.gmra.mxu0 %v1772
    %v1774 = vpop.f32.mrf.mxu0
    %v1775 = vadd.f32 %v1424, %v1774
    %v1776 = vpop.f32.mrf.mxu0
    %1777 = vmatprep.mubr.f32.mxu0 0.0
    %v1778 = vand.u32 %v99, 4294901760
    %1779 = vmatmul.mubr.f32.gmra.mxu0 %v1778
    %v1780 = vpop.f32.mrf.mxu0
    %v1781 = vadd.f32 %v1432, %v1780
    %v1782 = vpop.f32.mrf.mxu0
    %1783 = vmatprep.mubr.f32.mxu0 0.0
    %v1784 = vand.u32 %v102, 4294901760
    %1785 = vmatmul.mubr.f32.gmra.mxu0 %v1784
    %v1786 = vpop.f32.mrf.mxu0
    %v1787 = vadd.f32 %v1440, %v1786
    %v1788 = vpop.f32.mrf.mxu0
    %1789 = vmatprep.mubr.f32.mxu0 0.0
    %v1790 = vand.u32 %v105, 4294901760
    %1791 = vmatmul.mubr.f32.gmra.mxu0 %v1790
    %v1792 = vpop.f32.mrf.mxu0
    %v1793 = vadd.f32 %v1448, %v1792
    %v1794 = vpop.f32.mrf.mxu0
    %1795 = vmatprep.mubr.f32.mxu0 0.0
    %v1796 = vand.u32 %v108, 4294901760
    %1797 = vmatmul.mubr.f32.gmra.mxu0 %v1796
    %v1798 = vpop.f32.mrf.mxu0
    %v1799 = vadd.f32 %v1456, %v1798
    %v1800 = vpop.f32.mrf.mxu0
    %1801 = vmatprep.mubr.f32.mxu0 0.0
    %v1802 = vand.u32 %v111, 4294901760
    %1803 = vmatmul.mubr.f32.gmra.mxu0 %v1802
    %v1804 = vpop.f32.mrf.mxu0
    %v1805 = vadd.f32 %v1464, %v1804
    %v1806 = vpop.f32.mrf.mxu0
    %1807 = vmatprep.mubr.f32.mxu0 0.0
    %v1808 = vand.u32 %v114, 4294901760
    %1809 = vmatmul.mubr.f32.gmra.mxu0 %v1808
    %v1810 = vpop.f32.mrf.mxu0
    %v1811 = vadd.f32 %v1472, %v1810
    %v1812 = vpop.f32.mrf.mxu0
    %1813 = vmatprep.mubr.f32.mxu0 0.0
    %v1814 = vand.u32 %v117, 4294901760
    %1815 = vmatmul.mubr.f32.gmra.mxu0 %v1814
    %v1816 = vpop.f32.mrf.mxu0
    %v1817 = vadd.f32 %v1480, %v1816
    %v1818 = vpop.f32.mrf.mxu0
    %1819 = vmatprep.mubr.f32.mxu0 0.0
    %v1820 = vand.u32 %v120, 4294901760
    %1821 = vmatmul.mubr.f32.gmra.mxu0 %v1820
    %v1822 = vpop.f32.mrf.mxu0
    %v1823 = vadd.f32 %v1488, %v1822
    %v1824 = vpop.f32.mrf.mxu0
    %1825 = vmatprep.mubr.f32.mxu0 0.0
    %v1826 = vand.u32 %v123, 4294901760
    %1827 = vmatmul.mubr.f32.gmra.mxu0 %v1826
    %v1828 = vpop.f32.mrf.mxu0
    %v1829 = vadd.f32 %v1496, %v1828
    %v1830 = vpop.f32.mrf.mxu0
    %1831 = vmatprep.mubr.f32.mxu0 0.0
    %v1832 = vand.u32 %v126, 4294901760
    %1833 = vmatmul.mubr.f32.gmra.mxu0 %v1832
    %v1834 = vpop.f32.mrf.mxu0
    %v1835 = vadd.f32 %v1504, %v1834
    %v1836 = vpop.f32.mrf.mxu0
    %1837 = vmatprep.mubr.f32.mxu0 0.0
    %v1838 = vand.u32 %v129, 4294901760
    %1839 = vmatmul.mubr.f32.gmra.mxu0 %v1838
    %v1840 = vpop.f32.mrf.mxu0
    %v1841 = vadd.f32 %v1512, %v1840
    %v1842 = vpop.f32.mrf.mxu0
    %1843 = vmatprep.mubr.f32.mxu0 0.0
    %v1844 = vand.u32 %v132, 4294901760
    %1845 = vmatmul.mubr.f32.gmra.mxu0 %v1844
    %v1846 = vpop.f32.mrf.mxu0
    %v1847 = vadd.f32 %v1520, %v1846
    %v1848 = vpop.f32.mrf.mxu0
    %1849 = vmatprep.mubr.f32.mxu0 0.0
    %v1850 = vand.u32 %v135, 4294901760
    %1851 = vmatmul.mubr.f32.gmra.mxu0 %v1850
    %v1852 = vpop.f32.mrf.mxu0
    %v1853 = vadd.f32 %v1528, %v1852
    %v1854 = vpop.f32.mrf.mxu0
    %1855 = vmatprep.mubr.f32.mxu0 0.0
    %v1856 = vand.u32 %v138, 4294901760
    %1857 = vmatmul.mubr.f32.gmra.mxu0 %v1856
    %v1858 = vpop.f32.mrf.mxu0
    %v1859 = vadd.f32 %v1536, %v1858
    %v1860 = vpop.f32.mrf.mxu0
    %1861 = vmatprep.mubr.f32.mxu0 0.0
    %v1862 = vand.u32 %v141, 4294901760
    %1863 = vmatmul.mubr.f32.gmra.mxu0 %v1862
    %v1864 = vpop.f32.mrf.mxu0
    %v1865 = vadd.f32 %v1544, %v1864
    %v1866 = vpop.f32.mrf.mxu0
    %1867 = vmatprep.mubr.f32.mxu0 0.0
    %v1868 = vand.u32 %v144, 4294901760
    %1869 = vmatmul.mubr.f32.gmra.mxu0 %v1868
    %v1870 = vpop.f32.mrf.mxu0
    %v1871 = vadd.f32 %v1552, %v1870
    %v1872 = vpop.f32.mrf.mxu0
    %1873 = vmatprep.mubr.f32.mxu0 0.0
    %v1874 = vand.u32 %v147, 4294901760
    %1875 = vmatmul.mubr.f32.gmra.mxu0 %v1874
    %v1876 = vpop.f32.mrf.mxu0
    %v1877 = vadd.f32 %v1560, %v1876
    %v1878 = vpop.f32.mrf.mxu0
    %1879 = vmatprep.mubr.f32.mxu0 0.0
    %v1880 = vand.u32 %v150, 4294901760
    %1881 = vmatmul.mubr.f32.gmra.mxu0 %v1880
    %v1882 = vpop.f32.mrf.mxu0
    %v1883 = vadd.f32 %v1568, %v1882
    %v1884 = vpop.f32.mrf.mxu0
    %1885 = vmatprep.mubr.f32.mxu0 0.0
    %v1886 = vand.u32 %v153, 4294901760
    %1887 = vmatmul.mubr.f32.gmra.mxu0 %v1886
    %v1888 = vpop.f32.mrf.mxu0
    %v1889 = vadd.f32 %v1576, %v1888
    %v1890 = vpop.f32.mrf.mxu0
    %1891 = vmatprep.mubr.f32.mxu0 0.0
    %v1892 = vand.u32 %v156, 4294901760
    %1893 = vmatmul.mubr.f32.gmra.mxu0 %v1892
    %v1894 = vpop.f32.mrf.mxu0
    %v1895 = vadd.f32 %v1584, %v1894
    %v1896 = vpop.f32.mrf.mxu0
    %1897 = vmatprep.mubr.f32.mxu0 0.0
    %v1898 = vand.u32 %v159, 4294901760
    %1899 = vmatmul.mubr.f32.gmra.mxu0 %v1898
    %v1900 = vpop.f32.mrf.mxu0
    %v1901 = vadd.f32 %v1592, %v1900
    %v1902 = vpop.f32.mrf.mxu0
    %1903 = vmatprep.mubr.f32.mxu0 0.0
    %v1904 = vand.u32 %v162, 4294901760
    %1905 = vmatmul.mubr.f32.gmra.mxu0 %v1904
    %v1906 = vpop.f32.mrf.mxu0
    %v1907 = vadd.f32 %v1600, %v1906
    %v1908 = vpop.f32.mrf.mxu0
    %1909 = vmatprep.mubr.f32.mxu0 0.0
    %v1910 = vand.u32 %v165, 4294901760
    %1911 = vmatmul.mubr.f32.gmra.mxu0 %v1910
    %v1912 = vpop.f32.mrf.mxu0
    %v1913 = vadd.f32 %v1608, %v1912
    %v1914 = vpop.f32.mrf.mxu0
    %1915 = vdwg.mxu0
    %1916 = vmatprep.subr.mxu0 0.0
    %v1917 = vand.u32 %v213, 4294901760
    %1918 = vmatpush1.xpose.msra.mxu0 %v1917
    %1919 = vmatprep.subr.mxu0 0.0
    %v1920 = vand.u32 %v210, 4294901760
    %1921 = vmatpush1.xpose.msra.mxu0 %v1920
    %1922 = vmatprep.subr.mxu0 0.0
    %v1923 = vand.u32 %v207, 4294901760
    %1924 = vmatpush1.xpose.msra.mxu0 %v1923
    %1925 = vmatprep.subr.mxu0 0.0
    %v1926 = vand.u32 %v204, 4294901760
    %1927 = vmatpush1.xpose.msra.mxu0 %v1926
    %1928 = vmatprep.subr.mxu0 0.0
    %v1929 = vand.u32 %v201, 4294901760
    %1930 = vmatpush1.xpose.msra.mxu0 %v1929
    %1931 = vmatprep.subr.mxu0 0.0
    %v1932 = vand.u32 %v198, 4294901760
    %1933 = vmatpush1.xpose.msra.mxu0 %v1932
    %1934 = vmatprep.subr.mxu0 0.0
    %v1935 = vand.u32 %v195, 4294901760
    %1936 = vmatpush1.xpose.msra.mxu0 %v1935
    %1937 = vmatprep.subr.mxu0 0.0
    %v1938 = vand.u32 %v192, 4294901760
    %1939 = vmatpush1.xpose.msra.mxu0 %v1938
    %1940 = vmatprep.subr.mxu0 0.0
    %v1941 = vand.u32 %v189, 4294901760
    %1942 = vmatpush1.xpose.msra.mxu0 %v1941
    %1943 = vmatprep.subr.mxu0 0.0
    %v1944 = vand.u32 %v186, 4294901760
    %1945 = vmatpush1.xpose.msra.mxu0 %v1944
    %1946 = vmatprep.subr.mxu0 0.0
    %v1947 = vand.u32 %v183, 4294901760
    %1948 = vmatpush1.xpose.msra.mxu0 %v1947
    %1949 = vmatprep.subr.mxu0 0.0
    %v1950 = vand.u32 %v180, 4294901760
    %1951 = vmatpush1.xpose.msra.mxu0 %v1950
    %1952 = vmatprep.subr.mxu0 0.0
    %v1953 = vand.u32 %v177, 4294901760
    %1954 = vmatpush1.xpose.msra.mxu0 %v1953
    %1955 = vmatprep.subr.mxu0 0.0
    %v1956 = vand.u32 %v174, 4294901760
    %1957 = vmatpush1.xpose.msra.mxu0 %v1956
    %1958 = vmatprep.subr.mxu0 0.0
    %v1959 = vand.u32 %v171, 4294901760
    %1960 = vmatpush1.xpose.msra.mxu0 %v1959
    %1961 = vmatprep.subr.mxu0 0.0
    %v1962 = vand.u32 %v168, 4294901760
    %1963 = vmatpush1.xpose.msra.mxu0 %v1962
    %1964 = vmatprep.subr.mxu0 0.0
    %1965 = vmatpush2.xpose.msra.mxu0 0.0
    %1966 = vmatprep.subr.mxu0 0.0
    %1967 = vmatpush2.xpose.msra.mxu0 0.0
    %1968 = vmatprep.subr.mxu0 0.0
    %1969 = vmatpush2.xpose.msra.mxu0 0.0
    %1970 = vmatprep.subr.mxu0 0.0
    %1971 = vmatpush2.xpose.msra.mxu0 0.0
    %1972 = vmatprep.subr.mxu0 0.0
    %1973 = vmatpush2.xpose.msra.mxu0 0.0
    %1974 = vmatprep.subr.mxu0 0.0
    %1975 = vmatpush2.xpose.msra.mxu0 0.0
    %1976 = vmatprep.subr.mxu0 0.0
    %1977 = vmatpush2.xpose.msra.mxu0 0.0
    %1978 = vmatprep.subr.mxu0 0.0
    %1979 = vmatpush2.xpose.msra.mxu0 0.0
    %1980 = vmatprep.subr.mxu0 0.0
    %1981 = vmatpush2.xpose.msra.mxu0 0.0
    %1982 = vmatprep.subr.mxu0 0.0
    %1983 = vmatpush2.xpose.msra.mxu0 0.0
    %1984 = vmatprep.subr.mxu0 0.0
    %1985 = vmatpush2.xpose.msra.mxu0 0.0
    %1986 = vmatprep.subr.mxu0 0.0
    %1987 = vmatpush2.xpose.msra.mxu0 0.0
    %1988 = vmatprep.subr.mxu0 0.0
    %1989 = vmatpush2.xpose.msra.mxu0 0.0
    %1990 = vmatprep.subr.mxu0 0.0
    %1991 = vmatpush2.xpose.msra.mxu0 0.0
    %1992 = vmatprep.subr.mxu0 0.0
    %1993 = vmatpush2.xpose.msra.mxu0 0.0
    %1994 = vmatprep.subr.mxu0 0.0
    %1995 = vmatpush2.xpose.msra.mxu0 0.0
    %1996 = vmatprep.mubr.f32.mxu0 0.0
    %v1997 = vand.u32 %v72, 4294901760
    %1998 = vmatmul.mubr.f32.gmra.mxu0 %v1997
    %v1999 = vpop.f32.mrf.mxu0
    %v2000 = vadd.f32 %v1727, %v1999
    %v2001 = vpop.f32.mrf.mxu0
    %2002 = vmatprep.mubr.f32.mxu0 0.0
    %v2003 = vand.u32 %v75, 4294901760
    %2004 = vmatmul.mubr.f32.gmra.mxu0 %v2003
    %v2005 = vpop.f32.mrf.mxu0
    %v2006 = vadd.f32 %v1733, %v2005
    %v2007 = vpop.f32.mrf.mxu0
    %2008 = vmatprep.mubr.f32.mxu0 0.0
    %v2009 = vand.u32 %v78, 4294901760
    %2010 = vmatmul.mubr.f32.gmra.mxu0 %v2009
    %v2011 = vpop.f32.mrf.mxu0
    %v2012 = vadd.f32 %v1739, %v2011
    %v2013 = vpop.f32.mrf.mxu0
    %2014 = vmatprep.mubr.f32.mxu0 0.0
    %v2015 = vand.u32 %v81, 4294901760
    %2016 = vmatmul.mubr.f32.gmra.mxu0 %v2015
    %v2017 = vpop.f32.mrf.mxu0
    %v2018 = vadd.f32 %v1745, %v2017
    %v2019 = vpop.f32.mrf.mxu0
    %2020 = vmatprep.mubr.f32.mxu0 0.0
    %v2021 = vand.u32 %v84, 4294901760
    %2022 = vmatmul.mubr.f32.gmra.mxu0 %v2021
    %v2023 = vpop.f32.mrf.mxu0
    %v2024 = vadd.f32 %v1751, %v2023
    %v2025 = vpop.f32.mrf.mxu0
    %2026 = vmatprep.mubr.f32.mxu0 0.0
    %v2027 = vand.u32 %v87, 4294901760
    %2028 = vmatmul.mubr.f32.gmra.mxu0 %v2027
    %v2029 = vpop.f32.mrf.mxu0
    %v2030 = vadd.f32 %v1757, %v2029
    %v2031 = vpop.f32.mrf.mxu0
    %2032 = vmatprep.mubr.f32.mxu0 0.0
    %v2033 = vand.u32 %v90, 4294901760
    %2034 = vmatmul.mubr.f32.gmra.mxu0 %v2033
    %v2035 = vpop.f32.mrf.mxu0
    %v2036 = vadd.f32 %v1763, %v2035
    %v2037 = vpop.f32.mrf.mxu0
    %2038 = vmatprep.mubr.f32.mxu0 0.0
    %v2039 = vand.u32 %v93, 4294901760
    %2040 = vmatmul.mubr.f32.gmra.mxu0 %v2039
    %v2041 = vpop.f32.mrf.mxu0
    %v2042 = vadd.f32 %v1769, %v2041
    %v2043 = vpop.f32.mrf.mxu0
    %2044 = vmatprep.mubr.f32.mxu0 0.0
    %v2045 = vand.u32 %v96, 4294901760
    %2046 = vmatmul.mubr.f32.gmra.mxu0 %v2045
    %v2047 = vpop.f32.mrf.mxu0
    %v2048 = vadd.f32 %v1775, %v2047
    %v2049 = vpop.f32.mrf.mxu0
    %2050 = vmatprep.mubr.f32.mxu0 0.0
    %v2051 = vand.u32 %v99, 4294901760
    %2052 = vmatmul.mubr.f32.gmra.mxu0 %v2051
    %v2053 = vpop.f32.mrf.mxu0
    %v2054 = vadd.f32 %v1781, %v2053
    %v2055 = vpop.f32.mrf.mxu0
    %2056 = vmatprep.mubr.f32.mxu0 0.0
    %v2057 = vand.u32 %v102, 4294901760
    %2058 = vmatmul.mubr.f32.gmra.mxu0 %v2057
    %v2059 = vpop.f32.mrf.mxu0
    %v2060 = vadd.f32 %v1787, %v2059
    %v2061 = vpop.f32.mrf.mxu0
    %2062 = vmatprep.mubr.f32.mxu0 0.0
    %v2063 = vand.u32 %v105, 4294901760
    %2064 = vmatmul.mubr.f32.gmra.mxu0 %v2063
    %v2065 = vpop.f32.mrf.mxu0
    %v2066 = vadd.f32 %v1793, %v2065
    %v2067 = vpop.f32.mrf.mxu0
    %2068 = vmatprep.mubr.f32.mxu0 0.0
    %v2069 = vand.u32 %v108, 4294901760
    %2070 = vmatmul.mubr.f32.gmra.mxu0 %v2069
    %v2071 = vpop.f32.mrf.mxu0
    %v2072 = vadd.f32 %v1799, %v2071
    %v2073 = vpop.f32.mrf.mxu0
    %2074 = vmatprep.mubr.f32.mxu0 0.0
    %v2075 = vand.u32 %v111, 4294901760
    %2076 = vmatmul.mubr.f32.gmra.mxu0 %v2075
    %v2077 = vpop.f32.mrf.mxu0
    %v2078 = vadd.f32 %v1805, %v2077
    %v2079 = vpop.f32.mrf.mxu0
    %2080 = vmatprep.mubr.f32.mxu0 0.0
    %v2081 = vand.u32 %v114, 4294901760
    %2082 = vmatmul.mubr.f32.gmra.mxu0 %v2081
    %v2083 = vpop.f32.mrf.mxu0
    %v2084 = vadd.f32 %v1811, %v2083
    %v2085 = vpop.f32.mrf.mxu0
    %2086 = vmatprep.mubr.f32.mxu0 0.0
    %v2087 = vand.u32 %v117, 4294901760
    %2088 = vmatmul.mubr.f32.gmra.mxu0 %v2087
    %v2089 = vpop.f32.mrf.mxu0
    %v2090 = vadd.f32 %v1817, %v2089
    %v2091 = vpop.f32.mrf.mxu0
    %2092 = vmatprep.mubr.f32.mxu0 0.0
    %v2093 = vand.u32 %v120, 4294901760
    %2094 = vmatmul.mubr.f32.gmra.mxu0 %v2093
    %v2095 = vpop.f32.mrf.mxu0
    %v2096 = vadd.f32 %v1823, %v2095
    %v2097 = vpop.f32.mrf.mxu0
    %2098 = vmatprep.mubr.f32.mxu0 0.0
    %v2099 = vand.u32 %v123, 4294901760
    %2100 = vmatmul.mubr.f32.gmra.mxu0 %v2099
    %v2101 = vpop.f32.mrf.mxu0
    %v2102 = vadd.f32 %v1829, %v2101
    %v2103 = vpop.f32.mrf.mxu0
    %2104 = vmatprep.mubr.f32.mxu0 0.0
    %v2105 = vand.u32 %v126, 4294901760
    %2106 = vmatmul.mubr.f32.gmra.mxu0 %v2105
    %v2107 = vpop.f32.mrf.mxu0
    %v2108 = vadd.f32 %v1835, %v2107
    %v2109 = vpop.f32.mrf.mxu0
    %2110 = vmatprep.mubr.f32.mxu0 0.0
    %v2111 = vand.u32 %v129, 4294901760
    %2112 = vmatmul.mubr.f32.gmra.mxu0 %v2111
    %v2113 = vpop.f32.mrf.mxu0
    %v2114 = vadd.f32 %v1841, %v2113
    %v2115 = vpop.f32.mrf.mxu0
    %2116 = vmatprep.mubr.f32.mxu0 0.0
    %v2117 = vand.u32 %v132, 4294901760
    %2118 = vmatmul.mubr.f32.gmra.mxu0 %v2117
    %v2119 = vpop.f32.mrf.mxu0
    %v2120 = vadd.f32 %v1847, %v2119
    %v2121 = vpop.f32.mrf.mxu0
    %2122 = vmatprep.mubr.f32.mxu0 0.0
    %v2123 = vand.u32 %v135, 4294901760
    %2124 = vmatmul.mubr.f32.gmra.mxu0 %v2123
    %v2125 = vpop.f32.mrf.mxu0
    %v2126 = vadd.f32 %v1853, %v2125
    %v2127 = vpop.f32.mrf.mxu0
    %2128 = vmatprep.mubr.f32.mxu0 0.0
    %v2129 = vand.u32 %v138, 4294901760
    %2130 = vmatmul.mubr.f32.gmra.mxu0 %v2129
    %v2131 = vpop.f32.mrf.mxu0
    %v2132 = vadd.f32 %v1859, %v2131
    %v2133 = vpop.f32.mrf.mxu0
    %2134 = vmatprep.mubr.f32.mxu0 0.0
    %v2135 = vand.u32 %v141, 4294901760
    %2136 = vmatmul.mubr.f32.gmra.mxu0 %v2135
    %v2137 = vpop.f32.mrf.mxu0
    %v2138 = vadd.f32 %v1865, %v2137
    %v2139 = vpop.f32.mrf.mxu0
    %2140 = vmatprep.mubr.f32.mxu0 0.0
    %v2141 = vand.u32 %v144, 4294901760
    %2142 = vmatmul.mubr.f32.gmra.mxu0 %v2141
    %v2143 = vpop.f32.mrf.mxu0
    %v2144 = vadd.f32 %v1871, %v2143
    %v2145 = vpop.f32.mrf.mxu0
    %2146 = vmatprep.mubr.f32.mxu0 0.0
    %v2147 = vand.u32 %v147, 4294901760
    %2148 = vmatmul.mubr.f32.gmra.mxu0 %v2147
    %v2149 = vpop.f32.mrf.mxu0
    %v2150 = vadd.f32 %v1877, %v2149
    %v2151 = vpop.f32.mrf.mxu0
    %2152 = vmatprep.mubr.f32.mxu0 0.0
    %v2153 = vand.u32 %v150, 4294901760
    %2154 = vmatmul.mubr.f32.gmra.mxu0 %v2153
    %v2155 = vpop.f32.mrf.mxu0
    %v2156 = vadd.f32 %v1883, %v2155
    %v2157 = vpop.f32.mrf.mxu0
    %2158 = vmatprep.mubr.f32.mxu0 0.0
    %v2159 = vand.u32 %v153, 4294901760
    %2160 = vmatmul.mubr.f32.gmra.mxu0 %v2159
    %v2161 = vpop.f32.mrf.mxu0
    %v2162 = vadd.f32 %v1889, %v2161
    %v2163 = vpop.f32.mrf.mxu0
    %2164 = vmatprep.mubr.f32.mxu0 0.0
    %v2165 = vand.u32 %v156, 4294901760
    %2166 = vmatmul.mubr.f32.gmra.mxu0 %v2165
    %v2167 = vpop.f32.mrf.mxu0
    %v2168 = vadd.f32 %v1895, %v2167
    %v2169 = vpop.f32.mrf.mxu0
    %2170 = vmatprep.mubr.f32.mxu0 0.0
    %v2171 = vand.u32 %v159, 4294901760
    %2172 = vmatmul.mubr.f32.gmra.mxu0 %v2171
    %v2173 = vpop.f32.mrf.mxu0
    %v2174 = vadd.f32 %v1901, %v2173
    %v2175 = vpop.f32.mrf.mxu0
    %2176 = vmatprep.mubr.f32.mxu0 0.0
    %v2177 = vand.u32 %v162, 4294901760
    %2178 = vmatmul.mubr.f32.gmra.mxu0 %v2177
    %v2179 = vpop.f32.mrf.mxu0
    %v2180 = vadd.f32 %v1907, %v2179
    %v2181 = vpop.f32.mrf.mxu0
    %2182 = vmatprep.mubr.f32.mxu0 0.0
    %v2183 = vand.u32 %v165, 4294901760
    %2184 = vmatmul.mubr.f32.gmra.mxu0 %v2183
    %v2185 = vpop.f32.mrf.mxu0
    %v2186 = vadd.f32 %v1913, %v2185
    %v2187 = vpop.f32.mrf.mxu0
    %2188 = vdwg.mxu0
    %2189 = vst [vmem:[#allocation2] sm:$0xff] %v2000
    %2190 = vst [vmem:[#allocation2 + $0x8] sm:$0xff] %v2006
    %2191 = vst [vmem:[#allocation2 + $0x10] sm:$0xff] %v2012
    %2192 = vst [vmem:[#allocation2 + $0x18] sm:$0xff] %v2018
    %2193 = vst [vmem:[#allocation2 + $0x20] sm:$0xff] %v2024
    %2194 = vst [vmem:[#allocation2 + $0x28] sm:$0xff] %v2030
    %2195 = vst [vmem:[#allocation2 + $0x30] sm:$0xff] %v2036
    %2196 = vst [vmem:[#allocation2 + $0x38] sm:$0xff] %v2042
    %2197 = vst [vmem:[#allocation2 + $0x40] sm:$0xff] %v2048
    %2198 = vst [vmem:[#allocation2 + $0x48] sm:$0xff] %v2054
    %2199 = vst [vmem:[#allocation2 + $0x50] sm:$0xff] %v2060
    %2200 = vst [vmem:[#allocation2 + $0x58] sm:$0xff] %v2066
    %2201 = vst [vmem:[#allocation2 + $0x60] sm:$0xff] %v2072
    %2202 = vst [vmem:[#allocation2 + $0x68] sm:$0xff] %v2078
    %2203 = vst [vmem:[#allocation2 + $0x70] sm:$0xff] %v2084
    %2204 = vst [vmem:[#allocation2 + $0x78] sm:$0xff] %v2090
    %2205 = vst [vmem:[#allocation2 + $0x80] sm:$0xff] %v2096
    %2206 = vst [vmem:[#allocation2 + $0x88] sm:$0xff] %v2102
    %2207 = vst [vmem:[#allocation2 + $0x90] sm:$0xff] %v2108
    %2208 = vst [vmem:[#allocation2 + $0x98] sm:$0xff] %v2114
    %2209 = vst [vmem:[#allocation2 + $0xa0] sm:$0xff] %v2120
    %2210 = vst [vmem:[#allocation2 + $0xa8] sm:$0xff] %v2126
    %2211 = vst [vmem:[#allocation2 + $0xb0] sm:$0xff] %v2132
    %2212 = vst [vmem:[#allocation2 + $0xb8] sm:$0xff] %v2138
    %2213 = vst [vmem:[#allocation2 + $0xc0] sm:$0xff] %v2144
    %2214 = vst [vmem:[#allocation2 + $0xc8] sm:$0xff] %v2150
    %2215 = vst [vmem:[#allocation2 + $0xd0] sm:$0xff] %v2156
    %2216 = vst [vmem:[#allocation2 + $0xd8] sm:$0xff] %v2162
    %2217 = vst [vmem:[#allocation2 + $0xe0] sm:$0xff] %v2168
    %2218 = vst [vmem:[#allocation2 + $0xe8] sm:$0xff] %v2174
    %2219 = vst [vmem:[#allocation2 + $0xf0] sm:$0xff] %v2180
    %2220 = vst [vmem:[#allocation2 + $0xf8] sm:$0xff] %v2186
    // Predicated region
    $region14: #{encoder_with_fc.1} parent=1 // pred_check
      _
    $region15: #{encoder_with_fc.1} parent=1 // pred_check_branch
      %2222 = sbr.rel (0) target = $region17
    $region16: #{encoder_with_fc.1} parent=1 // pred_region
      %s2224 = ssub.s32 4096, 4096
      %2225 = vsyncadd [#allocation3], %s2224
      %s2226 = sshll.u32 [#allocation2], 4
      %s2227 = int_to_ptr.vmem [resolvable:$true] %s2226
      %2232 = dma.vmem_to_hbm [thread:$0]  %s2227, 4096, %s3, [#allocation3], 128, 128, 8
    $region17: #{encoder_with_fc.1} parent=1 // pred_fallthru
      _
    // Predicated region
    $region18: #{encoder_with_fc.1} parent=1 // pred_check
      _
    $region19: #{encoder_with_fc.1} parent=1 // pred_check_branch
      %2234 = sbr.rel (0) target = $region21
    $region20: #{encoder_with_fc.1} parent=1 // pred_region
      %2235 = dma.done [#allocation3], 4096
    $region21: #{encoder_with_fc.1} parent=1 // pred_fallthru
      _
    %2236 = vsyncpa [#allocation3], 1

</llo_original>
